<compile_context>
chip_gen: v7x
topology: tpu7x:2x2x1
jax: 0.10.0
libtpu: 0.0.40
codegen_flags: <defaults>
</compile_context>

<pallas_src>
import functools

import jax
import jax.numpy as jnp
from jax.experimental import pallas as pl
from jax.experimental.pallas import tpu as pltpu

EPS = 1e-5


# --------------------------------------------------------------------------- #
# In-kernel helpers
# --------------------------------------------------------------------------- #
def _bn_scale_shift(bn_ref, inv_count):
    """bn_ref holds a packed (C, 4) f32 block: [gamma, beta, sum, sumsq]."""
    p = bn_ref[...]
    gamma, beta = p[:, 0:1], p[:, 1:2]
    mean = p[:, 2:3] * inv_count
    # Clamp the one-pass variance (E[x^2] - mean^2 can round slightly negative).
    var = jnp.maximum(p[:, 3:4] * inv_count - mean * mean, 0.0)
    scale = gamma * jax.lax.rsqrt(var + EPS)      # rsqrt -> EUP slot
    shift = beta - mean * scale
    return scale, shift


def _partial_stats(acc_f32):
    """Per-tile, per-channel [sum, sumsq] of an f32 (C, tile_M) accumulator."""
    s = jnp.sum(acc_f32, axis=1, keepdims=True)
    ss = jnp.sum(acc_f32 * acc_f32, axis=1, keepdims=True)
    return jnp.concatenate([s, ss], axis=1)[None, :, :]        # (1, C, 2)


# --------------------------------------------------------------------------- #
# Kernels
# --------------------------------------------------------------------------- #
def _conv1x1_stats_kernel(*refs, inv_count, apply_bn):
    """[optional BN+ReLU] -> 1x1 conv (matmul) -> write tile + partial BN stats."""
    if apply_bn:
        bn_ref, x_ref, w_ref, h_ref, st_ref = refs
        scale, shift = _bn_scale_shift(bn_ref, inv_count)
        x = jnp.maximum(x_ref[...].astype(jnp.float32) * scale + shift, 0.0)
        x = x.astype(w_ref.dtype)                 # cast only at the dot input
    else:
        x_ref, w_ref, h_ref, st_ref = refs
        x = x_ref[...]
    acc = jnp.dot(w_ref[...], x, preferred_element_type=jnp.float32)
    st_ref[...] = _partial_stats(acc)
    h_ref[...] = acc.astype(h_ref.dtype)


def _conv3x3_stats_kernel(bn_ref, h1_ref, w_ref, mask_ref, h2_ref, st_ref,
                          *, inv_count, W):
    """BN1+ReLU -> 3x3 conv (pad=1) as ONE im2col matmul -> tile + partial stats."""
    tile_m = h1_ref.shape[1]
    scale, shift = _bn_scale_shift(bn_ref, inv_count)
    h = jnp.maximum(h1_ref[...].astype(jnp.float32) * scale + shift, 0.0)   # f32
    masks = mask_ref[...]                                                   # (9, tile_m)

    taps = []
    for kh in range(3):
        for kw in range(3):
            d = (kh - 1) * W + (kw - 1)                    # flat-index shift
            shifted = h if d == 0 else pltpu.roll(h, shift=(-d) % tile_m, axis=1)
            taps.append(shifted * masks[kh * 3 + kw][None, :])
    patches = jnp.concatenate(taps, axis=0).astype(w_ref.dtype)   # (9*Cin, tile_m)

    acc = jnp.dot(w_ref[...], patches, preferred_element_type=jnp.float32)
    st_ref[...] = _partial_stats(acc)
    h2_ref[...] = acc.astype(h2_ref.dtype)


def _bn_add_relu_kernel(bn_ref, h_ref, x_ref, o_ref, *, inv_count):
    """BN3 -> + identity -> ReLU."""
    scale, shift = _bn_scale_shift(bn_ref, inv_count)
    h = h_ref[...].astype(jnp.float32) * scale + shift
    o_ref[...] = jnp.maximum(h + x_ref[...].astype(jnp.float32), 0.0)


# --------------------------------------------------------------------------- #
# Host-side helpers
# --------------------------------------------------------------------------- #
def _make_tap_masks(H, W, imgs_per_tile):
    """Precomputed (9, tile_M) 0/1 border-validity masks (same for every tile)."""
    hw = H * W
    idx = jnp.arange(hw, dtype=jnp.int32)
    h_idx, w_idx = idx // W, idx % W
    rows = []
    for kh in range(3):
        for kw in range(3):
            dh, dw = kh - 1, kw - 1
            valid = ((h_idx + dh >= 0) & (h_idx + dh < H) &
                     (w_idx + dw >= 0) & (w_idx + dw < W)).astype(jnp.float32)
            rows.append(jnp.tile(valid, imgs_per_tile))
    return jnp.stack(rows, axis=0)                 # (9, imgs_per_tile*H*W)


def _pack_bn(gamma, beta, partial_stats):
    """Pack gamma/beta + reduced [sum, sumsq] into one (C, 4) f32 input."""
    tot = jnp.sum(partial_stats, axis=0)           # (C, 2) tiny cross-tile reduction
    return jnp.concatenate(
        [gamma.reshape(-1, 1), beta.reshape(-1, 1), tot], axis=1).astype(jnp.float32)


# --------------------------------------------------------------------------- #
# Forward wrapper
# --------------------------------------------------------------------------- #
def bottleneck_forward(x_nchw, params, *, imgs_per_tile=2, matmul_dtype=jnp.bfloat16):
    w1, g1, b1, w2, g2, b2, w3, g3, b3 = params
    N, Cin, H, W = x_nchw.shape
    width = w1.shape[1]
    Cexp = w3.shape[1]
    assert Cin == Cexp, "identity residual requires in_channel == out_channel*expansion"
    assert N % imgs_per_tile == 0
    n_tiles = N // imgs_per_tile
    tile_m = imgs_per_tile * H * W
    assert tile_m % 128 == 0, "tiles must stay lane-dense (multiple of 128 lanes)"
    M = N * H * W
    inv_count = 1.0 / M

    # NCHW -> (C, N*H*W) lane-dense layout (boundary transform only).
    x2d = jnp.transpose(x_nchw, (1, 0, 2, 3)).reshape(Cin, M).astype(jnp.float32)
    x_mm = x2d.astype(matmul_dtype)                # bf16 copy feeding the first matmul

    # Weight repack (tiny host-side ops): 1x1 -> (Cout, Cin); 3x3 -> (Cout, 9*Cin).
    w1k = w1.T.astype(matmul_dtype)
    w2k = jnp.transpose(w2, (2, 0, 1)).reshape(width, 9 * width).astype(matmul_dtype)
    w3k = w3.T.astype(matmul_dtype)

    masks = _make_tap_masks(H, W, imgs_per_tile)   # (9, tile_m) f32

    cparams = pltpu.CompilerParams(
        dimension_semantics=("parallel",),         # independent tiles -> v7x 2-TC sharding
        vmem_limit_bytes=64 * 1024 * 1024,         # raise scoped-VMEM default explicitly
    )

    def tiled(c):                                  # (C, M) array tiled along lanes
        return pl.BlockSpec((c, tile_m), lambda i: (0, i))

    def full(shape):                               # whole (small) array every step
        n = len(shape)
        return pl.BlockSpec(shape, lambda i, n=n: (0,) * n)

    def stats_spec(c):                             # per-tile partial-stats block
        return pl.BlockSpec((1, c, 2), lambda i: (i, 0, 0))

    def stats_shape(c):
        return jax.ShapeDtypeStruct((n_tiles, c, 2), jnp.float32)

    # ---- stage 1: conv1x1 (tiled matmul) + BN1 partial stats -----------------
    h1, st1 = pl.pallas_call(
        functools.partial(_conv1x1_stats_kernel, inv_count=inv_count, apply_bn=False),
        out_shape=(jax.ShapeDtypeStruct((width, M), matmul_dtype), stats_shape(width)),
        grid_spec=pltpu.PrefetchScalarGridSpec(
            num_scalar_prefetch=0, grid=(n_tiles,),
            in_specs=[tiled(Cin), full((width, Cin))],
            out_specs=(tiled(width), stats_spec(width))),
        compiler_params=cparams,
    )(x_mm, w1k)
    bn1 = _pack_bn(g1, b1, st1)

    # ---- stage 2: BN1+ReLU -> conv3x3 (single im2col matmul) + BN2 stats -----
    h2, st2 = pl.pallas_call(
        functools.partial(_conv3x3_stats_kernel, inv_count=inv_count, W=W),
        out_shape=(jax.ShapeDtypeStruct((width, M), matmul_dtype), stats_shape(width)),
        grid_spec=pltpu.PrefetchScalarGridSpec(
            num_scalar_prefetch=0, grid=(n_tiles,),
            in_specs=[full((width, 4)), tiled(width),
                      full((width, 9 * width)), full((9, tile_m))],
            out_specs=(tiled(width), stats_spec(width))),
        compiler_params=cparams,
    )(bn1, h1, w2k, masks)
    bn2 = _pack_bn(g2, b2, st2)

    # ---- stage 3: BN2+ReLU -> conv1x1 + BN3 stats ----------------------------
    h3, st3 = pl.pallas_call(
        functools.partial(_conv1x1_stats_kernel, inv_count=inv_count, apply_bn=True),
        out_shape=(jax.ShapeDtypeStruct((Cexp, M), matmul_dtype), stats_shape(Cexp)),
        grid_spec=pltpu.PrefetchScalarGridSpec(
            num_scalar_prefetch=0, grid=(n_tiles,),
            in_specs=[full((width, 4)), tiled(width), full((Cexp, width))],
            out_specs=(tiled(Cexp), stats_spec(Cexp))),
        compiler_params=cparams,
    )(bn2, h2, w3k)
    bn3 = _pack_bn(g3, b3, st3)

    # ---- stage 4: BN3 -> + identity -> ReLU (fully parallel tiles) -----------
    out2d = pl.pallas_call(
        functools.partial(_bn_add_relu_kernel, inv_count=inv_count),
        out_shape=jax.ShapeDtypeStruct((Cexp, M), jnp.float32),
        grid_spec=pltpu.PrefetchScalarGridSpec(
            num_scalar_prefetch=0, grid=(n_tiles,),
            in_specs=[full((Cexp, 4)), tiled(Cexp), tiled(Cexp)],
            out_specs=tiled(Cexp)),
        compiler_params=cparams,
    )(bn3, h3, x2d)

    return jnp.transpose(out2d.reshape(Cexp, N, H, W), (1, 0, 2, 3))   # -> NCHW


# --------------------------------------------------------------------------- #
# Parameters
# --------------------------------------------------------------------------- #
def init_params(key, in_channel, out_channel, groups=1, base_width=64):
    width = int(out_channel * (base_width / 64.0)) * groups
    cexp = out_channel * 4                         # expansion = 4
    ks = jax.random.split(key, 9)
    # conv weights stored as (Cin, Cout); 3x3 as (kh*kw, Cin, Cout)
    w1 = 0.1 * jax.random.normal(ks[0], (in_channel, width), jnp.float32)
    w2 = 0.1 * jax.random.normal(ks[1], (9, width, width), jnp.float32)
    w3 = 0.1 * jax.random.normal(ks[2], (width, cexp), jnp.float32)
    g1 = jax.random.uniform(ks[3], (1, width), jnp.float32, 0.5, 1.5)
    b1 = 0.1 * jax.random.normal(ks[4], (1, width), jnp.float32)
    g2 = jax.random.uniform(ks[5], (1, width), jnp.float32, 0.5, 1.5)
    b2 = 0.1 * jax.random.normal(ks[6], (1, width), jnp.float32)
    g3 = jax.random.uniform(ks[7], (1, cexp), jnp.float32, 0.5, 1.5)
    b3 = 0.1 * jax.random.normal(ks[8], (1, cexp), jnp.float32)
    return (w1, g1, b1, w2, g2, b2, w3, g3, b3)


# --------------------------------------------------------------------------- #
# Pure-JAX reference (PyTorch training-mode semantics, f32 throughout)
# --------------------------------------------------------------------------- #
def _bn_ref(x, gamma, beta):
    mean = jnp.mean(x, axis=(0, 1, 2), keepdims=True)
    var = jnp.mean((x - mean) ** 2, axis=(0, 1, 2), keepdims=True)
    return ((x - mean) * jax.lax.rsqrt(var + EPS)
            * gamma.reshape(1, 1, 1, -1) + beta.reshape(1, 1, 1, -1))


def reference_forward(x_nchw, params):
    w1, g1, b1, w2, g2, b2, w3, g3, b3 = params
    x = jnp.transpose(x_nchw, (0, 2, 3, 1)).astype(jnp.float32)
    h = jnp.einsum('nhwc,cd->nhwd', x, w1)
    h = jnp.maximum(_bn_ref(h, g1, b1), 0.0)
    w2_hwio = w2.reshape(3, 3, w2.shape[1], w2.shape[2])
    h = jax.lax.conv_general_dilated(h, w2_hwio, window_strides=(1, 1),
                                     padding=((1, 1), (1, 1)),
                                     dimension_numbers=('NHWC', 'HWIO', 'NHWC'))
    h = jnp.maximum(_bn_ref(h, g2, b2), 0.0)
    h = jnp.einsum('nhwc,cd->nhwd', h, w3)
    h = _bn_ref(h, g3, b3)
    out = jnp.maximum(h + x, 0.0)
    return jnp.transpose(out, (0, 3, 1, 2))


# --------------------------------------------------------------------------- #
if __name__ == "__main__":
    key = jax.random.PRNGKey(0)
    k_x, k_p = jax.random.split(key)

    # BottleNeck(in_channel=32, out_channel=8, stride=1, downsample=None)
    # width = 8, expansion*out = 32 == in_channel -> identity residual.
    # N=4 images of 16x16 -> M=1024 lanes; 2 images per tile -> 512-lane tiles, grid=(2,).
    N, out_channel, H, W = 4, 8, 16, 16
    in_channel = out_channel * 4
    x = jax.random.normal(k_x, (N, in_channel, H, W), jnp.float32)   # NCHW like PyTorch
    params = init_params(k_p, in_channel, out_channel)

    fwd = jax.jit(bottleneck_forward, static_argnames=("imgs_per_tile", "matmul_dtype"))
    ref = reference_forward(x, params)

    # f32 matmul path: faithful to the PyTorch module (tight tolerance).
    out_f32 = jax.block_until_ready(fwd(x, params, matmul_dtype=jnp.float32))
    assert out_f32.shape == (N, in_channel, H, W)
    assert jnp.allclose(out_f32, ref, atol=1e-4, rtol=1e-4), \
        f"f32 max abs diff {float(jnp.max(jnp.abs(out_f32 - ref)))}"

    # bf16 matmul-operand path (performance default): f32 accumulation / BN stats,
    # tolerance loosened to bf16 operand precision.
    out_bf16 = jax.block_until_ready(fwd(x, params, matmul_dtype=jnp.bfloat16))
    assert out_bf16.shape == (N, in_channel, H, W)
    assert jnp.allclose(out_bf16, ref, atol=1e-1, rtol=1e-1), \
        f"bf16 max abs diff {float(jnp.max(jnp.abs(out_bf16 - ref)))}"

    print("KERNEL_OK")
</pallas_src>

<mosaic_0001>
module attributes {stable_mosaic.version = 11 : i64} {
  func.func @_conv1x1_stats_kernel(%arg0: i32, %arg1: memref<32x512xf32, #tpu.memory_space<vmem>>, %arg2: memref<8x32xf32, #tpu.memory_space<vmem>>, %arg3: memref<8x512xf32, #tpu.memory_space<vmem>>, %arg4: memref<1x8x2xf32, #tpu.memory_space<vmem>>) attributes {dimension_semantics = [#tpu.dimension_semantics<parallel>], iteration_bounds = array<i64: 2>, scalar_prefetch = 0 : i64, scratch_operands = 0 : i64, tpu.core_type = #tpu.core_type<tc>, window_params = [{transform_indices = @transform_0, window_bounds = array<i64: 32, 512>}, {pipeline_mode = #tpu.pipeline_mode<synchronous>, transform_indices = @transform_1, window_bounds = array<i64: 8, 32>}, {transform_indices = @transform_2, window_bounds = array<i64: 8, 512>}, {transform_indices = @transform_3, window_bounds = array<i64: 1, 8, 2>}]} {
    %c0 = arith.constant 0 : index
    %c0_0 = arith.constant 0 : index
    %0 = vector.load %arg1[%c0, %c0_0] : memref<32x512xf32, #tpu.memory_space<vmem>>, vector<32x512xf32>
    %c0_1 = arith.constant 0 : index
    %c0_2 = arith.constant 0 : index
    %1 = vector.load %arg2[%c0_1, %c0_2] : memref<8x32xf32, #tpu.memory_space<vmem>>, vector<8x32xf32>
    %cst = arith.constant dense<0.000000e+00> : vector<8x512xf32>
    %2 = tpu.matmul %1, %0, %cst {dimension_numbers = #tpu.dot_dimension_numbers<[1], [0], [0], [1], [0, 0, 1, 1], [], []>} : vector<8x32xf32>, vector<32x512xf32>, vector<8x512xf32> -> vector<8x512xf32>
    %cst_3 = arith.constant dense<0.000000e+00> : vector<8xf32>
    %3 = vector.multi_reduction <add>, %2, %cst_3 [1] : vector<8x512xf32> to vector<8xf32>
    %4 = vector.shape_cast %3 : vector<8xf32> to vector<8x1xf32>
    %5 = arith.mulf %2, %2 : vector<8x512xf32>
    %cst_4 = arith.constant dense<0.000000e+00> : vector<8xf32>
    %6 = vector.multi_reduction <add>, %5, %cst_4 [1] : vector<8x512xf32> to vector<8xf32>
    %7 = vector.shape_cast %6 : vector<8xf32> to vector<8x1xf32>
    %8 = tpu.concatenate %4, %7 in 1 : vector<8x1xf32>, vector<8x1xf32> -> vector<8x2xf32>
    %9 = vector.shape_cast %8 : vector<8x2xf32> to vector<1x8x2xf32>
    %c0_5 = arith.constant 0 : index
    %c0_6 = arith.constant 0 : index
    %c0_7 = arith.constant 0 : index
    %10 = vector.load %arg4[%c0_5, %c0_6, %c0_7] : memref<1x8x2xf32, #tpu.memory_space<vmem>>, vector<1x8x2xf32>
    tpu.vector_store %arg4[%c0_5, %c0_6, %c0_7], %9 {strides = array<i32>} : memref<1x8x2xf32, #tpu.memory_space<vmem>>, vector<1x8x2xf32>,
    %c0_8 = arith.constant 0 : index
    %c0_9 = arith.constant 0 : index
    %11 = vector.load %arg3[%c0_8, %c0_9] : memref<8x512xf32, #tpu.memory_space<vmem>>, vector<8x512xf32>
    tpu.vector_store %arg3[%c0_8, %c0_9], %2 {strides = array<i32>} : memref<8x512xf32, #tpu.memory_space<vmem>>, vector<8x512xf32>,
    return
  }
  func.func @transform_0(%arg0: i32) -> (i32, i32) {
    %c0_i32 = arith.constant 0 : i32
    %c0_i32_0 = arith.constant 0 : i32
    return %c0_i32, %arg0 : i32, i32
  }
  func.func @transform_1(%arg0: i32) -> (i32, i32) {
    %c0_i32 = arith.constant 0 : i32
    %c0_i32_0 = arith.constant 0 : i32
    %c0_i32_1 = arith.constant 0 : i32
    return %c0_i32, %c0_i32_0 : i32, i32
  }
  func.func @transform_2(%arg0: i32) -> (i32, i32) {
    %c0_i32 = arith.constant 0 : i32
    %c0_i32_0 = arith.constant 0 : i32
    return %c0_i32, %arg0 : i32, i32
  }
  func.func @transform_3(%arg0: i32) -> (i32, i32, i32) {
    %c0_i32 = arith.constant 0 : i32
    %c0_i32_0 = arith.constant 0 : i32
    %c0_i32_1 = arith.constant 0 : i32
    return %arg0, %c0_i32, %c0_i32_0 : i32, i32, i32
  }
}

module attributes {stable_mosaic.version = 11 : i64} {
  func.func @_conv3x3_stats_kernel(%arg0: i32, %arg1: memref<8x4xf32, #tpu.memory_space<vmem>>, %arg2: memref<8x512xf32, #tpu.memory_space<vmem>>, %arg3: memref<8x72xf32, #tpu.memory_space<vmem>>, %arg4: memref<9x512xf32, #tpu.memory_space<vmem>>, %arg5: memref<8x512xf32, #tpu.memory_space<vmem>>, %arg6: memref<1x8x2xf32, #tpu.memory_space<vmem>>) attributes {dimension_semantics = [#tpu.dimension_semantics<parallel>], iteration_bounds = array<i64: 2>, scalar_prefetch = 0 : i64, scratch_operands = 0 : i64, tpu.core_type = #tpu.core_type<tc>, window_params = [{pipeline_mode = #tpu.pipeline_mode<synchronous>, transform_indices = @transform_0, window_bounds = array<i64: 8, 4>}, {transform_indices = @transform_1, window_bounds = array<i64: 8, 512>}, {pipeline_mode = #tpu.pipeline_mode<synchronous>, transform_indices = @transform_2, window_bounds = array<i64: 8, 72>}, {pipeline_mode = #tpu.pipeline_mode<synchronous>, transform_indices = @transform_3, window_bounds = array<i64: 9, 512>}, {transform_indices = @transform_4, window_bounds = array<i64: 8, 512>}, {transform_indices = @transform_5, window_bounds = array<i64: 1, 8, 2>}]} {
    %c0 = arith.constant 0 : index
    %c0_0 = arith.constant 0 : index
    %0 = vector.load %arg1[%c0, %c0_0] : memref<8x4xf32, #tpu.memory_space<vmem>>, vector<8x4xf32>
    %1 = vector.extract_strided_slice %0 {offsets = [0, 0], sizes = [8, 1], strides = [1, 1]} : vector<8x4xf32> to vector<8x1xf32>
    %2 = vector.extract_strided_slice %0 {offsets = [0, 1], sizes = [8, 1], strides = [1, 1]} : vector<8x4xf32> to vector<8x1xf32>
    %3 = vector.extract_strided_slice %0 {offsets = [0, 2], sizes = [8, 1], strides = [1, 1]} : vector<8x4xf32> to vector<8x1xf32>
    %cst = arith.constant 9.765625E-4 : f32
    %4 = vector.broadcast %cst : f32 to vector<8x1xf32>
    %5 = arith.mulf %3, %4 : vector<8x1xf32>
    %6 = vector.extract_strided_slice %0 {offsets = [0, 3], sizes = [8, 1], strides = [1, 1]} : vector<8x4xf32> to vector<8x1xf32>
    %cst_1 = arith.constant 9.765625E-4 : f32
    %7 = vector.broadcast %cst_1 : f32 to vector<8x1xf32>
    %8 = arith.mulf %6, %7 : vector<8x1xf32>
    %9 = arith.mulf %5, %5 : vector<8x1xf32>
    %10 = arith.subf %8, %9 : vector<8x1xf32>
    %cst_2 = arith.constant 0.000000e+00 : f32
    %11 = vector.broadcast %cst_2 : f32 to vector<8x1xf32>
    %12 = arith.maximumf %10, %11 : vector<8x1xf32>
    %cst_3 = arith.constant 9.99999974E-6 : f32
    %13 = vector.broadcast %cst_3 : f32 to vector<8x1xf32>
    %14 = arith.addf %12, %13 : vector<8x1xf32>
    %15 = math.rsqrt %14 : vector<8x1xf32>
    %16 = arith.mulf %1, %15 : vector<8x1xf32>
    %17 = arith.mulf %5, %16 : vector<8x1xf32>
    %18 = arith.subf %2, %17 : vector<8x1xf32>
    %c0_4 = arith.constant 0 : index
    %c0_5 = arith.constant 0 : index
    %19 = vector.load %arg2[%c0_4, %c0_5] : memref<8x512xf32, #tpu.memory_space<vmem>>, vector<8x512xf32>
    %20 = vector.broadcast %16 : vector<8x1xf32> to vector<8x512xf32>
    %21 = arith.mulf %19, %20 : vector<8x512xf32>
    %22 = vector.broadcast %18 : vector<8x1xf32> to vector<8x512xf32>
    %23 = arith.addf %21, %22 : vector<8x512xf32>
    %cst_6 = arith.constant 0.000000e+00 : f32
    %24 = vector.broadcast %cst_6 : f32 to vector<8x512xf32>
    %25 = arith.maximumf %23, %24 : vector<8x512xf32>
    %c0_7 = arith.constant 0 : index
    %c0_8 = arith.constant 0 : index
    %26 = vector.load %arg4[%c0_7, %c0_8] : memref<9x512xf32, #tpu.memory_space<vmem>>, vector<9x512xf32>
    %c17_i32 = arith.constant 17 : i32
    %27 = tpu.dynamic_rotate %25 by %c17_i32 dim 1 : vector<8x512xf32>, i32 -> vector<8x512xf32>
    %28 = vector.extract_strided_slice %26 {offsets = [0, 0], sizes = [1, 512], strides = [1, 1]} : vector<9x512xf32> to vector<1x512xf32>
    %29 = vector.shape_cast %28 : vector<1x512xf32> to vector<512xf32>
    %30 = vector.shape_cast %29 : vector<512xf32> to vector<1x512xf32>
    %31 = vector.broadcast %30 : vector<1x512xf32> to vector<8x512xf32>
    %32 = arith.mulf %27, %31 : vector<8x512xf32>
    %c16_i32 = arith.constant 16 : i32
    %33 = tpu.dynamic_rotate %25 by %c16_i32 dim 1 : vector<8x512xf32>, i32 -> vector<8x512xf32>
    %34 = vector.extract_strided_slice %26 {offsets = [1, 0], sizes = [1, 512], strides = [1, 1]} : vector<9x512xf32> to vector<1x512xf32>
    %35 = vector.shape_cast %34 : vector<1x512xf32> to vector<512xf32>
    %36 = vector.shape_cast %35 : vector<512xf32> to vector<1x512xf32>
    %37 = vector.broadcast %36 : vector<1x512xf32> to vector<8x512xf32>
    %38 = arith.mulf %33, %37 : vector<8x512xf32>
    %c15_i32 = arith.constant 15 : i32
    %39 = tpu.dynamic_rotate %25 by %c15_i32 dim 1 : vector<8x512xf32>, i32 -> vector<8x512xf32>
    %40 = vector.extract_strided_slice %26 {offsets = [2, 0], sizes = [1, 512], strides = [1, 1]} : vector<9x512xf32> to vector<1x512xf32>
    %41 = vector.shape_cast %40 : vector<1x512xf32> to vector<512xf32>
    %42 = vector.shape_cast %41 : vector<512xf32> to vector<1x512xf32>
    %43 = vector.broadcast %42 : vector<1x512xf32> to vector<8x512xf32>
    %44 = arith.mulf %39, %43 : vector<8x512xf32>
    %c1_i32 = arith.constant 1 : i32
    %45 = tpu.dynamic_rotate %25 by %c1_i32 dim 1 : vector<8x512xf32>, i32 -> vector<8x512xf32>
    %46 = vector.extract_strided_slice %26 {offsets = [3, 0], sizes = [1, 512], strides = [1, 1]} : vector<9x512xf32> to vector<1x512xf32>
    %47 = vector.shape_cast %46 : vector<1x512xf32> to vector<512xf32>
    %48 = vector.shape_cast %47 : vector<512xf32> to vector<1x512xf32>
    %49 = vector.broadcast %48 : vector<1x512xf32> to vector<8x512xf32>
    %50 = arith.mulf %45, %49 : vector<8x512xf32>
    %51 = vector.extract_strided_slice %26 {offsets = [4, 0], sizes = [1, 512], strides = [1, 1]} : vector<9x512xf32> to vector<1x512xf32>
    %52 = vector.shape_cast %51 : vector<1x512xf32> to vector<512xf32>
    %53 = vector.shape_cast %52 : vector<512xf32> to vector<1x512xf32>
    %54 = vector.broadcast %53 : vector<1x512xf32> to vector<8x512xf32>
    %55 = arith.mulf %25, %54 : vector<8x512xf32>
    %c511_i32 = arith.constant 511 : i32
    %56 = tpu.dynamic_rotate %25 by %c511_i32 dim 1 : vector<8x512xf32>, i32 -> vector<8x512xf32>
    %57 = vector.extract_strided_slice %26 {offsets = [5, 0], sizes = [1, 512], strides = [1, 1]} : vector<9x512xf32> to vector<1x512xf32>
    %58 = vector.shape_cast %57 : vector<1x512xf32> to vector<512xf32>
    %59 = vector.shape_cast %58 : vector<512xf32> to vector<1x512xf32>
    %60 = vector.broadcast %59 : vector<1x512xf32> to vector<8x512xf32>
    %61 = arith.mulf %56, %60 : vector<8x512xf32>
    %c497_i32 = arith.constant 497 : i32
    %62 = tpu.dynamic_rotate %25 by %c497_i32 dim 1 : vector<8x512xf32>, i32 -> vector<8x512xf32>
    %63 = vector.extract_strided_slice %26 {offsets = [6, 0], sizes = [1, 512], strides = [1, 1]} : vector<9x512xf32> to vector<1x512xf32>
    %64 = vector.shape_cast %63 : vector<1x512xf32> to vector<512xf32>
    %65 = vector.shape_cast %64 : vector<512xf32> to vector<1x512xf32>
    %66 = vector.broadcast %65 : vector<1x512xf32> to vector<8x512xf32>
    %67 = arith.mulf %62, %66 : vector<8x512xf32>
    %c496_i32 = arith.constant 496 : i32
    %68 = tpu.dynamic_rotate %25 by %c496_i32 dim 1 : vector<8x512xf32>, i32 -> vector<8x512xf32>
    %69 = vector.extract_strided_slice %26 {offsets = [7, 0], sizes = [1, 512], strides = [1, 1]} : vector<9x512xf32> to vector<1x512xf32>
    %70 = vector.shape_cast %69 : vector<1x512xf32> to vector<512xf32>
    %71 = vector.shape_cast %70 : vector<512xf32> to vector<1x512xf32>
    %72 = vector.broadcast %71 : vector<1x512xf32> to vector<8x512xf32>
    %73 = arith.mulf %68, %72 : vector<8x512xf32>
    %c495_i32 = arith.constant 495 : i32
    %74 = tpu.dynamic_rotate %25 by %c495_i32 dim 1 : vector<8x512xf32>, i32 -> vector<8x512xf32>
    %75 = vector.extract_strided_slice %26 {offsets = [8, 0], sizes = [1, 512], strides = [1, 1]} : vector<9x512xf32> to vector<1x512xf32>
    %76 = vector.shape_cast %75 : vector<1x512xf32> to vector<512xf32>
    %77 = vector.shape_cast %76 : vector<512xf32> to vector<1x512xf32>
    %78 = vector.broadcast %77 : vector<1x512xf32> to vector<8x512xf32>
    %79 = arith.mulf %74, %78 : vector<8x512xf32>
    %80 = tpu.concatenate %32, %38, %44, %50, %55, %61, %67, %73, %79 in 0 : vector<8x512xf32>, vector<8x512xf32>, vector<8x512xf32>, vector<8x512xf32>, vector<8x512xf32>, vector<8x512xf32>, vector<8x512xf32>, vector<8x512xf32>, vector<8x512xf32> -> vector<72x512xf32>
    %c0_9 = arith.constant 0 : index
    %c0_10 = arith.constant 0 : index
    %81 = vector.load %arg3[%c0_9, %c0_10] : memref<8x72xf32, #tpu.memory_space<vmem>>, vector<8x72xf32>
    %cst_11 = arith.constant dense<0.000000e+00> : vector<8x512xf32>
    %82 = tpu.matmul %81, %80, %cst_11 {dimension_numbers = #tpu.dot_dimension_numbers<[1], [0], [0], [1], [0, 0, 1, 1], [], []>} : vector<8x72xf32>, vector<72x512xf32>, vector<8x512xf32> -> vector<8x512xf32>
    %cst_12 = arith.constant dense<0.000000e+00> : vector<8xf32>
    %83 = vector.multi_reduction <add>, %82, %cst_12 [1] : vector<8x512xf32> to vector<8xf32>
    %84 = vector.shape_cast %83 : vector<8xf32> to vector<8x1xf32>
    %85 = arith.mulf %82, %82 : vector<8x512xf32>
    %cst_13 = arith.constant dense<0.000000e+00> : vector<8xf32>
    %86 = vector.multi_reduction <add>, %85, %cst_13 [1] : vector<8x512xf32> to vector<8xf32>
    %87 = vector.shape_cast %86 : vector<8xf32> to vector<8x1xf32>
    %88 = tpu.concatenate %84, %87 in 1 : vector<8x1xf32>, vector<8x1xf32> -> vector<8x2xf32>
    %89 = vector.shape_cast %88 : vector<8x2xf32> to vector<1x8x2xf32>
    %c0_14 = arith.constant 0 : index
    %c0_15 = arith.constant 0 : index
    %c0_16 = arith.constant 0 : index
    %90 = vector.load %arg6[%c0_14, %c0_15, %c0_16] : memref<1x8x2xf32, #tpu.memory_space<vmem>>, vector<1x8x2xf32>
    tpu.vector_store %arg6[%c0_14, %c0_15, %c0_16], %89 {strides = array<i32>} : memref<1x8x2xf32, #tpu.memory_space<vmem>>, vector<1x8x2xf32>,
    %c0_17 = arith.constant 0 : index
    %c0_18 = arith.constant 0 : index
    %91 = vector.load %arg5[%c0_17, %c0_18] : memref<8x512xf32, #tpu.memory_space<vmem>>, vector<8x512xf32>
    tpu.vector_store %arg5[%c0_17, %c0_18], %82 {strides = array<i32>} : memref<8x512xf32, #tpu.memory_space<vmem>>, vector<8x512xf32>,
    return
  }
  func.func @transform_0(%arg0: i32) -> (i32, i32) {
    %c0_i32 = arith.constant 0 : i32
    %c0_i32_0 = arith.constant 0 : i32
    %c0_i32_1 = arith.constant 0 : i32
    return %c0_i32, %c0_i32_0 : i32, i32
  }
  func.func @transform_1(%arg0: i32) -> (i32, i32) {
    %c0_i32 = arith.constant 0 : i32
    %c0_i32_0 = arith.constant 0 : i32
    return %c0_i32, %arg0 : i32, i32
  }
  func.func @transform_2(%arg0: i32) -> (i32, i32) {
    %c0_i32 = arith.constant 0 : i32
    %c0_i32_0 = arith.constant 0 : i32
    %c0_i32_1 = arith.constant 0 : i32
    return %c0_i32, %c0_i32_0 : i32, i32
  }
  func.func @transform_3(%arg0: i32) -> (i32, i32) {
    %c0_i32 = arith.constant 0 : i32
    %c0_i32_0 = arith.constant 0 : i32
    %c0_i32_1 = arith.constant 0 : i32
    return %c0_i32, %c0_i32_0 : i32, i32
  }
  func.func @transform_4(%arg0: i32) -> (i32, i32) {
    %c0_i32 = arith.constant 0 : i32
    %c0_i32_0 = arith.constant 0 : i32
    return %c0_i32, %arg0 : i32, i32
  }
  func.func @transform_5(%arg0: i32) -> (i32, i32, i32) {
    %c0_i32 = arith.constant 0 : i32
    %c0_i32_0 = arith.constant 0 : i32
    %c0_i32_1 = arith.constant 0 : i32
    return %arg0, %c0_i32, %c0_i32_0 : i32, i32, i32
  }
}

module attributes {stable_mosaic.version = 11 : i64} {
  func.func @_conv1x1_stats_kernel(%arg0: i32, %arg1: memref<8x4xf32, #tpu.memory_space<vmem>>, %arg2: memref<8x512xf32, #tpu.memory_space<vmem>>, %arg3: memref<32x8xf32, #tpu.memory_space<vmem>>, %arg4: memref<32x512xf32, #tpu.memory_space<vmem>>, %arg5: memref<1x32x2xf32, #tpu.memory_space<vmem>>) attributes {dimension_semantics = [#tpu.dimension_semantics<parallel>], iteration_bounds = array<i64: 2>, scalar_prefetch = 0 : i64, scratch_operands = 0 : i64, tpu.core_type = #tpu.core_type<tc>, window_params = [{pipeline_mode = #tpu.pipeline_mode<synchronous>, transform_indices = @transform_0, window_bounds = array<i64: 8, 4>}, {transform_indices = @transform_1, window_bounds = array<i64: 8, 512>}, {pipeline_mode = #tpu.pipeline_mode<synchronous>, transform_indices = @transform_2, window_bounds = array<i64: 32, 8>}, {transform_indices = @transform_3, window_bounds = array<i64: 32, 512>}, {transform_indices = @transform_4, window_bounds = array<i64: 1, 32, 2>}]} {
    %c0 = arith.constant 0 : index
    %c0_0 = arith.constant 0 : index
    %0 = vector.load %arg1[%c0, %c0_0] : memref<8x4xf32, #tpu.memory_space<vmem>>, vector<8x4xf32>
    %1 = vector.extract_strided_slice %0 {offsets = [0, 0], sizes = [8, 1], strides = [1, 1]} : vector<8x4xf32> to vector<8x1xf32>
    %2 = vector.extract_strided_slice %0 {offsets = [0, 1], sizes = [8, 1], strides = [1, 1]} : vector<8x4xf32> to vector<8x1xf32>
    %3 = vector.extract_strided_slice %0 {offsets = [0, 2], sizes = [8, 1], strides = [1, 1]} : vector<8x4xf32> to vector<8x1xf32>
    %cst = arith.constant 9.765625E-4 : f32
    %4 = vector.broadcast %cst : f32 to vector<8x1xf32>
    %5 = arith.mulf %3, %4 : vector<8x1xf32>
    %6 = vector.extract_strided_slice %0 {offsets = [0, 3], sizes = [8, 1], strides = [1, 1]} : vector<8x4xf32> to vector<8x1xf32>
    %cst_1 = arith.constant 9.765625E-4 : f32
    %7 = vector.broadcast %cst_1 : f32 to vector<8x1xf32>
    %8 = arith.mulf %6, %7 : vector<8x1xf32>
    %9 = arith.mulf %5, %5 : vector<8x1xf32>
    %10 = arith.subf %8, %9 : vector<8x1xf32>
    %cst_2 = arith.constant 0.000000e+00 : f32
    %11 = vector.broadcast %cst_2 : f32 to vector<8x1xf32>
    %12 = arith.maximumf %10, %11 : vector<8x1xf32>
    %cst_3 = arith.constant 9.99999974E-6 : f32
    %13 = vector.broadcast %cst_3 : f32 to vector<8x1xf32>
    %14 = arith.addf %12, %13 : vector<8x1xf32>
    %15 = math.rsqrt %14 : vector<8x1xf32>
    %16 = arith.mulf %1, %15 : vector<8x1xf32>
    %17 = arith.mulf %5, %16 : vector<8x1xf32>
    %18 = arith.subf %2, %17 : vector<8x1xf32>
    %c0_4 = arith.constant 0 : index
    %c0_5 = arith.constant 0 : index
    %19 = vector.load %arg2[%c0_4, %c0_5] : memref<8x512xf32, #tpu.memory_space<vmem>>, vector<8x512xf32>
    %20 = vector.broadcast %16 : vector<8x1xf32> to vector<8x512xf32>
    %21 = arith.mulf %19, %20 : vector<8x512xf32>
    %22 = vector.broadcast %18 : vector<8x1xf32> to vector<8x512xf32>
    %23 = arith.addf %21, %22 : vector<8x512xf32>
    %cst_6 = arith.constant 0.000000e+00 : f32
    %24 = vector.broadcast %cst_6 : f32 to vector<8x512xf32>
    %25 = arith.maximumf %23, %24 : vector<8x512xf32>
    %c0_7 = arith.constant 0 : index
    %c0_8 = arith.constant 0 : index
    %26 = vector.load %arg3[%c0_7, %c0_8] : memref<32x8xf32, #tpu.memory_space<vmem>>, vector<32x8xf32>
    %cst_9 = arith.constant dense<0.000000e+00> : vector<32x512xf32>
    %27 = tpu.matmul %26, %25, %cst_9 {dimension_numbers = #tpu.dot_dimension_numbers<[1], [0], [0], [1], [0, 0, 1, 1], [], []>} : vector<32x8xf32>, vector<8x512xf32>, vector<32x512xf32> -> vector<32x512xf32>
    %cst_10 = arith.constant dense<0.000000e+00> : vector<32xf32>
    %28 = vector.multi_reduction <add>, %27, %cst_10 [1] : vector<32x512xf32> to vector<32xf32>
    %29 = vector.shape_cast %28 : vector<32xf32> to vector<32x1xf32>
    %30 = arith.mulf %27, %27 : vector<32x512xf32>
    %cst_11 = arith.constant dense<0.000000e+00> : vector<32xf32>
    %31 = vector.multi_reduction <add>, %30, %cst_11 [1] : vector<32x512xf32> to vector<32xf32>
    %32 = vector.shape_cast %31 : vector<32xf32> to vector<32x1xf32>
    %33 = tpu.concatenate %29, %32 in 1 : vector<32x1xf32>, vector<32x1xf32> -> vector<32x2xf32>
    %34 = vector.shape_cast %33 : vector<32x2xf32> to vector<1x32x2xf32>
    %c0_12 = arith.constant 0 : index
    %c0_13 = arith.constant 0 : index
    %c0_14 = arith.constant 0 : index
    %35 = vector.load %arg5[%c0_12, %c0_13, %c0_14] : memref<1x32x2xf32, #tpu.memory_space<vmem>>, vector<1x32x2xf32>
    tpu.vector_store %arg5[%c0_12, %c0_13, %c0_14], %34 {strides = array<i32>} : memref<1x32x2xf32, #tpu.memory_space<vmem>>, vector<1x32x2xf32>,
    %c0_15 = arith.constant 0 : index
    %c0_16 = arith.constant 0 : index
    %36 = vector.load %arg4[%c0_15, %c0_16] : memref<32x512xf32, #tpu.memory_space<vmem>>, vector<32x512xf32>
    tpu.vector_store %arg4[%c0_15, %c0_16], %27 {strides = array<i32>} : memref<32x512xf32, #tpu.memory_space<vmem>>, vector<32x512xf32>,
    return
  }
  func.func @transform_0(%arg0: i32) -> (i32, i32) {
    %c0_i32 = arith.constant 0 : i32
    %c0_i32_0 = arith.constant 0 : i32
    %c0_i32_1 = arith.constant 0 : i32
    return %c0_i32, %c0_i32_0 : i32, i32
  }
  func.func @transform_1(%arg0: i32) -> (i32, i32) {
    %c0_i32 = arith.constant 0 : i32
    %c0_i32_0 = arith.constant 0 : i32
    return %c0_i32, %arg0 : i32, i32
  }
  func.func @transform_2(%arg0: i32) -> (i32, i32) {
    %c0_i32 = arith.constant 0 : i32
    %c0_i32_0 = arith.constant 0 : i32
    %c0_i32_1 = arith.constant 0 : i32
    return %c0_i32, %c0_i32_0 : i32, i32
  }
  func.func @transform_3(%arg0: i32) -> (i32, i32) {
    %c0_i32 = arith.constant 0 : i32
    %c0_i32_0 = arith.constant 0 : i32
    return %c0_i32, %arg0 : i32, i32
  }
  func.func @transform_4(%arg0: i32) -> (i32, i32, i32) {
    %c0_i32 = arith.constant 0 : i32
    %c0_i32_0 = arith.constant 0 : i32
    %c0_i32_1 = arith.constant 0 : i32
    return %arg0, %c0_i32, %c0_i32_0 : i32, i32, i32
  }
}

module attributes {stable_mosaic.version = 11 : i64} {
  func.func @_bn_add_relu_kernel(%arg0: i32, %arg1: memref<32x4xf32, #tpu.memory_space<vmem>>, %arg2: memref<32x512xf32, #tpu.memory_space<vmem>>, %arg3: memref<32x512xf32, #tpu.memory_space<vmem>>, %arg4: memref<32x512xf32, #tpu.memory_space<vmem>>) attributes {dimension_semantics = [#tpu.dimension_semantics<parallel>], iteration_bounds = array<i64: 2>, scalar_prefetch = 0 : i64, scratch_operands = 0 : i64, tpu.core_type = #tpu.core_type<tc>, window_params = [{pipeline_mode = #tpu.pipeline_mode<synchronous>, transform_indices = @transform_0, window_bounds = array<i64: 32, 4>}, {transform_indices = @transform_1, window_bounds = array<i64: 32, 512>}, {transform_indices = @transform_2, window_bounds = array<i64: 32, 512>}, {transform_indices = @transform_3, window_bounds = array<i64: 32, 512>}]} {
    %c0 = arith.constant 0 : index
    %c0_0 = arith.constant 0 : index
    %0 = vector.load %arg1[%c0, %c0_0] : memref<32x4xf32, #tpu.memory_space<vmem>>, vector<32x4xf32>
    %1 = vector.extract_strided_slice %0 {offsets = [0, 0], sizes = [32, 1], strides = [1, 1]} : vector<32x4xf32> to vector<32x1xf32>
    %2 = vector.extract_strided_slice %0 {offsets = [0, 1], sizes = [32, 1], strides = [1, 1]} : vector<32x4xf32> to vector<32x1xf32>
    %3 = vector.extract_strided_slice %0 {offsets = [0, 2], sizes = [32, 1], strides = [1, 1]} : vector<32x4xf32> to vector<32x1xf32>
    %cst = arith.constant 9.765625E-4 : f32
    %4 = vector.broadcast %cst : f32 to vector<32x1xf32>
    %5 = arith.mulf %3, %4 : vector<32x1xf32>
    %6 = vector.extract_strided_slice %0 {offsets = [0, 3], sizes = [32, 1], strides = [1, 1]} : vector<32x4xf32> to vector<32x1xf32>
    %cst_1 = arith.constant 9.765625E-4 : f32
    %7 = vector.broadcast %cst_1 : f32 to vector<32x1xf32>
    %8 = arith.mulf %6, %7 : vector<32x1xf32>
    %9 = arith.mulf %5, %5 : vector<32x1xf32>
    %10 = arith.subf %8, %9 : vector<32x1xf32>
    %cst_2 = arith.constant 0.000000e+00 : f32
    %11 = vector.broadcast %cst_2 : f32 to vector<32x1xf32>
    %12 = arith.maximumf %10, %11 : vector<32x1xf32>
    %cst_3 = arith.constant 9.99999974E-6 : f32
    %13 = vector.broadcast %cst_3 : f32 to vector<32x1xf32>
    %14 = arith.addf %12, %13 : vector<32x1xf32>
    %15 = math.rsqrt %14 : vector<32x1xf32>
    %16 = arith.mulf %1, %15 : vector<32x1xf32>
    %17 = arith.mulf %5, %16 : vector<32x1xf32>
    %18 = arith.subf %2, %17 : vector<32x1xf32>
    %c0_4 = arith.constant 0 : index
    %c0_5 = arith.constant 0 : index
    %19 = vector.load %arg2[%c0_4, %c0_5] : memref<32x512xf32, #tpu.memory_space<vmem>>, vector<32x512xf32>
    %20 = vector.broadcast %16 : vector<32x1xf32> to vector<32x512xf32>
    %21 = arith.mulf %19, %20 : vector<32x512xf32>
    %22 = vector.broadcast %18 : vector<32x1xf32> to vector<32x512xf32>
    %23 = arith.addf %21, %22 : vector<32x512xf32>
    %c0_6 = arith.constant 0 : index
    %c0_7 = arith.constant 0 : index
    %24 = vector.load %arg3[%c0_6, %c0_7] : memref<32x512xf32, #tpu.memory_space<vmem>>, vector<32x512xf32>
    %25 = arith.addf %23, %24 : vector<32x512xf32>
    %cst_8 = arith.constant 0.000000e+00 : f32
    %26 = vector.broadcast %cst_8 : f32 to vector<32x512xf32>
    %27 = arith.maximumf %25, %26 : vector<32x512xf32>
    %c0_9 = arith.constant 0 : index
    %c0_10 = arith.constant 0 : index
    %28 = vector.load %arg4[%c0_9, %c0_10] : memref<32x512xf32, #tpu.memory_space<vmem>>, vector<32x512xf32>
    tpu.vector_store %arg4[%c0_9, %c0_10], %27 {strides = array<i32>} : memref<32x512xf32, #tpu.memory_space<vmem>>, vector<32x512xf32>,
    return
  }
  func.func @transform_0(%arg0: i32) -> (i32, i32) {
    %c0_i32 = arith.constant 0 : i32
    %c0_i32_0 = arith.constant 0 : i32
    %c0_i32_1 = arith.constant 0 : i32
    return %c0_i32, %c0_i32_0 : i32, i32
  }
  func.func @transform_1(%arg0: i32) -> (i32, i32) {
    %c0_i32 = arith.constant 0 : i32
    %c0_i32_0 = arith.constant 0 : i32
    return %c0_i32, %arg0 : i32, i32
  }
  func.func @transform_2(%arg0: i32) -> (i32, i32) {
    %c0_i32 = arith.constant 0 : i32
    %c0_i32_0 = arith.constant 0 : i32
    return %c0_i32, %arg0 : i32, i32
  }
  func.func @transform_3(%arg0: i32) -> (i32, i32) {
    %c0_i32 = arith.constant 0 : i32
    %c0_i32_0 = arith.constant 0 : i32
    return %c0_i32, %arg0 : i32, i32
  }
}

</mosaic_0001>

<llo_original>
// kernel: bottleneck_forward.4
$region0: #{bottleneck_forward.4}
  #allocation0 [shape = 'u32[]', space=smem, size = 0x4, offset = 0x4, fixed_abs, tag = 'smem constant byte address 0x4 - core index']
  #allocation1 [shape = 'u32[144,128]{1,0:T(1,128)}', space=vmem, size = 0x12000, scoped, tag = 'internal scratch']
  %s0 = inlined_call_operand.hbm [shape: f32[32,1024], index: 0, kind: input, shape index: {}]
  %s1 = inlined_call_operand.hbm [shape: f32[8,32], index: 1, kind: input, shape index: {}]
  %s2 = inlined_call_operand.hbm [shape: f32[8,1024], index: 2, kind: output, shape index: {0}]
  %s3 = inlined_call_operand.hbm [shape: f32[2,8,2], index: 3, kind: output, shape index: {1}]
  %4 = xla_tuple %s2, %s3
  %s5 = sld [smem:[#allocation0]]
  $region57: #{bottleneck_forward.4} parent=0
    _
  %s7 = ssub.s32 1, %s5
  %s8 = scalar_select 0, %s7, %s5
  $region1: #{bottleneck_forward.4} parent=0
    #allocation2 [shape = 'u8[131072]{0}', space=vmem, size = 0x20000, scoped, tag = 'input window, operand 0']
    #allocation3 [shape = 's32[2]{0}', space=sflag, size = 0x8, scoped, tag = 'scoped memory for bottleneck_forward.4']
    #allocation4 [shape = 's32[2]{0}', space=sflag, size = 0x8, scoped, tag = 'scoped memory for bottleneck_forward.4']
    #allocation5 [shape = 'u8[4096]{0}', space=vmem, size = 0x1000, scoped, tag = 'input window, operand 1, single buffered']
    #allocation6 [shape = 's32[1]{0}', space=sflag, size = 0x4, scoped, tag = 'scoped memory for bottleneck_forward.4']
    #allocation7 [shape = 'u8[32768]{0}', space=vmem, size = 0x8000, scoped, tag = 'output window, operand 0']
    #allocation8 [shape = 'u8[8192]{0}', space=vmem, size = 0x2000, scoped, tag = 'output window, operand 1']
    #allocation9 [shape = 's32[2]{0}', space=sflag, size = 0x8, scoped, tag = 'scoped memory for bottleneck_forward.4']
    %9 = vsyncpa [#allocation3], 0
    %s10 = scalar_lea.sflag [#allocation3], 1
    %11 = vsyncpa %s10, 0
    %12 = vsyncpa [#allocation6], 0
    %13 = vsyncpa [#allocation4], 0
    %s14 = scalar_lea.sflag [#allocation4], 1
    %15 = vsyncpa %s14, 0
    %16 = vsyncpa [#allocation9], 0
    %s17 = scalar_lea.sflag [#allocation9], 1
    %18 = vsyncpa %s17, 0
    loop: start=0, step=1, limit=4
    $region2: #{bottleneck_forward.4} parent=1 // loop_pre_header
      _
    $region3: #{bottleneck_forward.4} parent=1 // loop_header
      %s20 = sphi 0, %s24
      %p21 = scmp.ge.s32.totalorder %s20, 4
      %s30 = sphi 0, %s32
      %s33 = sphi 0, %s30
      %s34 = sphi 0, %s33
      %s50 = sphi 0, %s34
      %s54 = sphi 0, %s54
      %s56 = sphi 0, %s54
      %s57 = sphi 0, %s56
      %s71 = sphi 0, %s57
      %s77 = sphi 0, %s79
      %s80 = sphi 0, %s77
      %s81 = sphi 0, %s80
      %s97 = sphi 0, %s81
      %s103 = sphi 0, %s105
      %s106 = sphi 0, %s103
      %s107 = sphi 0, %s106
      %s123 = sphi 0, %s107
    $region4: #{bottleneck_forward.4} parent=1 // loop_header_branch
      %23 = sbr.rel (%p21) target = $region8
    $region5: #{bottleneck_forward.4} parent=1 // loop_body
      %s25 = ssub.s32 %s20, 1
      %s26 = ssub.s32 %s20, 2
      %s27 = sadd.s32 %s20, 1
      %s28 = ssub.s32 %s20, %s27
      %p29 = scmp.eq.s32.totalorder %s28, 0
      %s31 = sadd.s32 %s30, 1
      %s32 = scalar_select %p29, %s30, %s31
      %p35 = pneg %p29
      %p36 = scmp.eq.s32.totalorder %s20, 1
      %p37 = por %p35, %p36
      %p38 = scmp.ne.s32.totalorder %s30, %s33
      %p39 = scmp.eq.s32.totalorder %s20, 0
      %p40 = por %p38, %p39
      %p41 = scmp.ne.s32.totalorder %s30, %s33
      %p42 = scmp.eq.s32.totalorder %s25, 1
      %p43 = por %p41, %p42
      %p44 = scmp.ne.s32.totalorder %s33, %s34
      %p45 = scmp.eq.s32.totalorder %s25, 0
      %p46 = por %p44, %p45
      %p47 = scmp.ne.s32.totalorder %s33, %s34
      %p48 = scmp.eq.s32.totalorder %s26, 1
      %p49 = por %p47, %p48
      %p51 = scmp.ne.s32.totalorder %s34, %s50
      %p52 = scmp.eq.s32.totalorder %s26, 0
      %p53 = por %p51, %p52
      %s55 = sadd.s32 %s54, 1
      %p58 = scmp.eq.s32.totalorder %s20, 1
      %p59 = scmp.ne.s32.totalorder %s54, %s56
      %p60 = scmp.eq.s32.totalorder %s20, 0
      %p61 = por %p59, %p60
      %p62 = scmp.ne.s32.totalorder %s54, %s56
      %p63 = scmp.eq.s32.totalorder %s25, 1
      %p64 = por %p62, %p63
      %p65 = scmp.ne.s32.totalorder %s56, %s57
      %p66 = scmp.eq.s32.totalorder %s25, 0
      %p67 = por %p65, %p66
      %p68 = scmp.ne.s32.totalorder %s56, %s57
      %p69 = scmp.eq.s32.totalorder %s26, 1
      %p70 = por %p68, %p69
      %p72 = scmp.ne.s32.totalorder %s57, %s71
      %p73 = scmp.eq.s32.totalorder %s26, 0
      %p74 = por %p72, %p73
      %s75 = ssub.s32 %s20, %s27
      %p76 = scmp.eq.s32.totalorder %s75, 0
      %s78 = sadd.s32 %s77, 1
      %s79 = scalar_select %p76, %s77, %s78
      %p82 = pneg %p76
      %p83 = scmp.eq.s32.totalorder %s20, 1
      %p84 = por %p82, %p83
      %p85 = scmp.ne.s32.totalorder %s77, %s80
      %p86 = scmp.eq.s32.totalorder %s20, 0
      %p87 = por %p85, %p86
      %p88 = scmp.ne.s32.totalorder %s77, %s80
      %p89 = scmp.eq.s32.totalorder %s25, 1
      %p90 = por %p88, %p89
      %p91 = scmp.ne.s32.totalorder %s80, %s81
      %p92 = scmp.eq.s32.totalorder %s25, 0
      %p93 = por %p91, %p92
      %p94 = scmp.ne.s32.totalorder %s80, %s81
      %p95 = scmp.eq.s32.totalorder %s26, 1
      %p96 = por %p94, %p95
      %p98 = scmp.ne.s32.totalorder %s81, %s97
      %p99 = scmp.eq.s32.totalorder %s26, 0
      %p100 = por %p98, %p99
      %s101 = ssub.s32 %s20, %s27
      %p102 = scmp.eq.s32.totalorder %s101, 0
      %s104 = sadd.s32 %s103, 1
      %s105 = scalar_select %p102, %s103, %s104
      %p108 = pneg %p102
      %p109 = scmp.eq.s32.totalorder %s20, 1
      %p110 = por %p108, %p109
      %p111 = scmp.ne.s32.totalorder %s103, %s106
      %p112 = scmp.eq.s32.totalorder %s20, 0
      %p113 = por %p111, %p112
      %p114 = scmp.ne.s32.totalorder %s103, %s106
      %p115 = scmp.eq.s32.totalorder %s25, 1
      %p116 = por %p114, %p115
      %p117 = scmp.ne.s32.totalorder %s106, %s107
      %p118 = scmp.eq.s32.totalorder %s25, 0
      %p119 = por %p117, %p118
      %p120 = scmp.ne.s32.totalorder %s106, %s107
      %p121 = scmp.eq.s32.totalorder %s26, 1
      %p122 = por %p120, %p121
      %p124 = scmp.ne.s32.totalorder %s107, %s123
      %p125 = scmp.eq.s32.totalorder %s26, 0
      %p126 = por %p124, %p125
      %p127 = scmp.le.s32.totalorder 1, %s20
      %p128 = scmp.lt.s32.totalorder %s20, 3
      %p129 = pnand %p127, %p128
      %p130 = pneg %p129
      // Predicated region
      $region9: #{bottleneck_forward.4} parent=5 // pred_check
        _
      $region10: #{bottleneck_forward.4} parent=5 // pred_check_branch
        %132 = sbr.rel (%p129) target = $region12
      $region11: #{bottleneck_forward.4} parent=5 // pred_region
        %s133 = ssub.s32 %s20, 1
        // Predicated region
        $region13: #{bottleneck_forward.4} parent=11 // pred_check
          %p134 = pneg %p67
        $region14: #{bottleneck_forward.4} parent=11 // pred_check_branch
          %136 = sbr.rel (%p134) target = $region16
        $region15: #{bottleneck_forward.4} parent=11 // pred_region
          %s138 = ssub.s32 128, 128
          %139 = vsyncadd [#allocation6], %s138
          %s141 = sshll.u32 [#allocation5], 4
          %s142 = int_to_ptr.vmem [resolvable:$true] %s141
          %144 = dma.hbm_to_vmem [thread:$0]  %s1, 128, %s142, [#allocation6]
        $region16: #{bottleneck_forward.4} parent=11 // pred_fallthru
          _
      $region12: #{bottleneck_forward.4} parent=5 // pred_fallthru
        _
      %p145 = scmp.lt.s32.totalorder %s20, 2
      // Predicated region
      $region17: #{bottleneck_forward.4} parent=5 // pred_check
        %p146 = pneg %p145
      $region18: #{bottleneck_forward.4} parent=5 // pred_check_branch
        %148 = sbr.rel (%p146) target = $region20
      $region19: #{bottleneck_forward.4} parent=5 // pred_region
        // Predicated region
        $region21: #{bottleneck_forward.4} parent=19 // pred_check
          %p149 = pneg %p40
        $region22: #{bottleneck_forward.4} parent=19 // pred_check_branch
          %151 = sbr.rel (%p149) target = $region24
        $region23: #{bottleneck_forward.4} parent=19 // pred_region
          %s152 = sand.u32 %s30, 1
          %s153 = scalar_lea.sflag [#allocation3], %s152
          %s154 = sand.u32 %s30, 1
          %s155 = smul.addr %s154, 128
          %s156 = scalar_lea.vmem [#allocation2], %s155
          %s157 = smul.u32 4, %s20
          %s159 = ssub.s32 2048, 2048
          %160 = vsyncadd %s153, %s159
          %s161 = smul.addr %s157, 128
          %s162 = scalar_lea.hbm %s0, %s161
          %s163 = sshll.u32 %s156, 4
          %s164 = int_to_ptr.vmem [resolvable:$true] %s163
          %169 = dma.hbm_to_vmem [thread:$0]  %s162, 2048, %s164, %s153, 1024, 512, 32
        $region24: #{bottleneck_forward.4} parent=19 // pred_fallthru
          _
      $region20: #{bottleneck_forward.4} parent=5 // pred_fallthru
        _
      %p170 = scmp.le.s32.totalorder 1, %s20
      %p171 = scmp.lt.s32.totalorder %s20, 3
      %p172 = pnand %p170, %p171
      %p173 = pneg %p172
      // Predicated region
      $region25: #{bottleneck_forward.4} parent=5 // pred_check
        _
      $region26: #{bottleneck_forward.4} parent=5 // pred_check_branch
        %175 = sbr.rel (%p172) target = $region28
      $region27: #{bottleneck_forward.4} parent=5 // pred_region
        %s176 = ssub.s32 %s20, 1
        %s177 = sand.u32 %s33, 1
        %s178 = scalar_lea.sflag [#allocation3], %s177
        %s179 = sand.u32 %s33, 1
        %s180 = smul.addr %s179, 128
        %s181 = scalar_lea.vmem [#allocation2], %s180
        // Predicated region
        $region29: #{bottleneck_forward.4} parent=27 // pred_check
          %p182 = pneg %p46
        $region30: #{bottleneck_forward.4} parent=27 // pred_check_branch
          %184 = sbr.rel (%p182) target = $region32
        $region31: #{bottleneck_forward.4} parent=27 // pred_region
          %185 = dma.done %s178, 2048
        $region32: #{bottleneck_forward.4} parent=27 // pred_fallthru
          _
        // Predicated region
        $region33: #{bottleneck_forward.4} parent=27 // pred_check
          %p186 = pneg %p67
        $region34: #{bottleneck_forward.4} parent=27 // pred_check_branch
          %188 = sbr.rel (%p186) target = $region36
        $region35: #{bottleneck_forward.4} parent=27 // pred_region
          %189 = dma.done [#allocation6], 128
        $region36: #{bottleneck_forward.4} parent=27 // pred_fallthru
          _
        %s190 = sand.u32 %s33, 1
        %s191 = scalar_lea.sflag [#allocation3], %s190
        %s192 = sand.u32 %s33, 1
        %s193 = smul.addr %s192, 128
        %s194 = scalar_lea.vmem [#allocation2], %s193
        %p195 = pneg %p46
        %p196 = pneg %p43
        %p197 = pneg %p67
        %p198 = pneg %p64
        %p199 = pneg %p93
        %p200 = pneg %p90
        %s201 = sand.u32 %s80, 1
        %s202 = scalar_lea.sflag [#allocation4], %s201
        %s203 = sand.u32 %s80, 1
        %s204 = smul.addr %s203, 32
        %s205 = scalar_lea.vmem [#allocation7], %s204
        %p206 = pneg %p119
        %p207 = pneg %p116
        %s208 = sand.u32 %s106, 1
        %s209 = scalar_lea.sflag [#allocation9], %s208
        %s210 = sand.u32 %s106, 1
        %s211 = smul.addr %s210, 8
        %s212 = scalar_lea.vmem [#allocation8], %s211
        %s213 = smul.u32 4, %s25
        %s214 = smul.u32 4, %s25
        %v215 = vld [vmem:[%s181] sm:$0xff]
        %v216 = vld [vmem:[%s181 + $0x8] sm:$0xff]
        %v217 = vld [vmem:[%s181 + $0x10] sm:$0xff]
        %v218 = vld [vmem:[%s181 + $0x18] sm:$0xff]
        %v219 = vld [vmem:[%s181 + $0x20] sm:$0xff]
        %v220 = vld [vmem:[%s181 + $0x28] sm:$0xff]
        %v221 = vld [vmem:[%s181 + $0x30] sm:$0xff]
        %v222 = vld [vmem:[%s181 + $0x38] sm:$0xff]
        %v223 = vld [vmem:[%s181 + $0x40] sm:$0xff]
        %v224 = vld [vmem:[%s181 + $0x48] sm:$0xff]
        %v225 = vld [vmem:[%s181 + $0x50] sm:$0xff]
        %v226 = vld [vmem:[%s181 + $0x58] sm:$0xff]
        %v227 = vld [vmem:[%s181 + $0x60] sm:$0xff]
        %v228 = vld [vmem:[%s181 + $0x68] sm:$0xff]
        %v229 = vld [vmem:[%s181 + $0x70] sm:$0xff]
        %v230 = vld [vmem:[%s181 + $0x78] sm:$0xff]
        %v231 = vld [vmem:[#allocation5] sm:$0xff]
        %vm232 = vcmask 261120
        %v234 = vsel %vm232, %v231, 0
        %236 = vmatprep.subr.mxu0 %v216
        %237 = vmatpush1.msra.mxu0 %v215
        %238 = vmatprep.subr.mxu0 %v220
        %239 = vmatpush1.msra.mxu0 %v219
        %240 = vmatprep.subr.mxu0 %v224
        %241 = vmatpush1.msra.mxu0 %v223
        %242 = vmatprep.subr.mxu0 %v228
        %243 = vmatpush1.msra.mxu0 %v227
        %244 = vmatprep.subr.mxu0 0.0
        %245 = vmatpush1.msra.mxu0 0.0
        %246 = vmatprep.subr.mxu0 0.0
        %247 = vmatpush1.msra.mxu0 0.0
        %248 = vmatprep.subr.mxu0 0.0
        %249 = vmatpush1.msra.mxu0 0.0
        %250 = vmatprep.subr.mxu0 0.0
        %251 = vmatpush1.msra.mxu0 0.0
        %252 = vmatprep.subr.mxu0 0.0
        %253 = vmatpush1.msra.mxu0 0.0
        %254 = vmatprep.subr.mxu0 0.0
        %255 = vmatpush1.msra.mxu0 0.0
        %256 = vmatprep.subr.mxu0 0.0
        %257 = vmatpush1.msra.mxu0 0.0
        %258 = vmatprep.subr.mxu0 0.0
        %259 = vmatpush1.msra.mxu0 0.0
        %260 = vmatprep.subr.mxu0 0.0
        %261 = vmatpush1.msra.mxu0 0.0
        %262 = vmatprep.subr.mxu0 0.0
        %263 = vmatpush1.msra.mxu0 0.0
        %264 = vmatprep.subr.mxu0 0.0
        %265 = vmatpush1.msra.mxu0 0.0
        %266 = vmatprep.subr.mxu0 0.0
        %267 = vmatpush1.msra.mxu0 0.0
        %268 = vmatprep.subr.mxu0 0.0
        %269 = vmatpush1.msra.mxu0 0.0
        %270 = vmatprep.subr.mxu0 0.0
        %271 = vmatpush1.msra.mxu0 0.0
        %272 = vmatprep.subr.mxu0 0.0
        %273 = vmatpush1.msra.mxu0 0.0
        %274 = vmatprep.subr.mxu0 0.0
        %275 = vmatpush1.msra.mxu0 0.0
        %276 = vmatprep.subr.mxu0 0.0
        %277 = vmatpush1.msra.mxu0 0.0
        %278 = vmatprep.subr.mxu0 0.0
        %279 = vmatpush1.msra.mxu0 0.0
        %280 = vmatprep.subr.mxu0 0.0
        %281 = vmatpush1.msra.mxu0 0.0
        %282 = vmatprep.subr.mxu0 0.0
        %283 = vmatpush1.msra.mxu0 0.0
        %284 = vmatprep.subr.mxu0 0.0
        %285 = vmatpush1.msra.mxu0 0.0
        %286 = vmatprep.subr.mxu0 0.0
        %287 = vmatpush1.msra.mxu0 0.0
        %288 = vmatprep.subr.mxu0 0.0
        %289 = vmatpush1.msra.mxu0 0.0
        %290 = vmatprep.subr.mxu0 0.0
        %291 = vmatpush1.msra.mxu0 0.0
        %292 = vmatprep.subr.mxu0 0.0
        %293 = vmatpush1.msra.mxu0 0.0
        %294 = vmatprep.subr.mxu0 0.0
        %295 = vmatpush1.msra.mxu0 0.0
        %296 = vmatprep.subr.mxu0 0.0
        %297 = vmatpush1.msra.mxu0 0.0
        %298 = vmatprep.subr.mxu0 0.0
        %299 = vmatpush1.msra.mxu0 0.0
        %300 = vmatprep.mubr.f32.mxu0 0.0
        %301 = vmatmul.mubr.f32.gmra.mrb[0].mxu0 %v234
        %v302 = vpop.f32.mrb[0].mxu0
        %v303 = vadd.f32 0.0, %v302
        %v304 = vpop.f32.mrb[0].mxu0
        %v305 = vadd.f32 0.0, %v304
        %306 = vdwg.mxu0
        %307 = vmatprep.subr.mxu0 %v218
        %308 = vmatpush1.msra.mxu0 %v217
        %309 = vmatprep.subr.mxu0 %v222
        %310 = vmatpush1.msra.mxu0 %v221
        %311 = vmatprep.subr.mxu0 %v226
        %312 = vmatpush1.msra.mxu0 %v225
        %313 = vmatprep.subr.mxu0 %v230
        %314 = vmatpush1.msra.mxu0 %v229
        %315 = vmatprep.subr.mxu0 0.0
        %316 = vmatpush1.msra.mxu0 0.0
        %317 = vmatprep.subr.mxu0 0.0
        %318 = vmatpush1.msra.mxu0 0.0
        %319 = vmatprep.subr.mxu0 0.0
        %320 = vmatpush1.msra.mxu0 0.0
        %321 = vmatprep.subr.mxu0 0.0
        %322 = vmatpush1.msra.mxu0 0.0
        %323 = vmatprep.subr.mxu0 0.0
        %324 = vmatpush1.msra.mxu0 0.0
        %325 = vmatprep.subr.mxu0 0.0
        %326 = vmatpush1.msra.mxu0 0.0
        %327 = vmatprep.subr.mxu0 0.0
        %328 = vmatpush1.msra.mxu0 0.0
        %329 = vmatprep.subr.mxu0 0.0
        %330 = vmatpush1.msra.mxu0 0.0
        %331 = vmatprep.subr.mxu0 0.0
        %332 = vmatpush1.msra.mxu0 0.0
        %333 = vmatprep.subr.mxu0 0.0
        %334 = vmatpush1.msra.mxu0 0.0
        %335 = vmatprep.subr.mxu0 0.0
        %336 = vmatpush1.msra.mxu0 0.0
        %337 = vmatprep.subr.mxu0 0.0
        %338 = vmatpush1.msra.mxu0 0.0
        %339 = vmatprep.subr.mxu0 0.0
        %340 = vmatpush1.msra.mxu0 0.0
        %341 = vmatprep.subr.mxu0 0.0
        %342 = vmatpush1.msra.mxu0 0.0
        %343 = vmatprep.subr.mxu0 0.0
        %344 = vmatpush1.msra.mxu0 0.0
        %345 = vmatprep.subr.mxu0 0.0
        %346 = vmatpush1.msra.mxu0 0.0
        %347 = vmatprep.subr.mxu0 0.0
        %348 = vmatpush1.msra.mxu0 0.0
        %349 = vmatprep.subr.mxu0 0.0
        %350 = vmatpush1.msra.mxu0 0.0
        %351 = vmatprep.subr.mxu0 0.0
        %352 = vmatpush1.msra.mxu0 0.0
        %353 = vmatprep.subr.mxu0 0.0
        %354 = vmatpush1.msra.mxu0 0.0
        %355 = vmatprep.subr.mxu0 0.0
        %356 = vmatpush1.msra.mxu0 0.0
        %357 = vmatprep.subr.mxu0 0.0
        %358 = vmatpush1.msra.mxu0 0.0
        %359 = vmatprep.subr.mxu0 0.0
        %360 = vmatpush1.msra.mxu0 0.0
        %361 = vmatprep.subr.mxu0 0.0
        %362 = vmatpush1.msra.mxu0 0.0
        %363 = vmatprep.subr.mxu0 0.0
        %364 = vmatpush1.msra.mxu0 0.0
        %365 = vmatprep.subr.mxu0 0.0
        %366 = vmatpush1.msra.mxu0 0.0
        %367 = vmatprep.subr.mxu0 0.0
        %368 = vmatpush1.msra.mxu0 0.0
        %369 = vmatprep.subr.mxu0 0.0
        %370 = vmatpush1.msra.mxu0 0.0
        %371 = vmatprep.mubr.f32.mxu0 0.0
        %372 = vmatmul.mubr.f32.gmra.mrb[0].mxu0 %v234
        %v373 = vpop.f32.mrb[0].mxu0
        %v374 = vadd.f32 0.0, %v373
        %v375 = vpop.f32.mrb[0].mxu0
        %v376 = vadd.f32 0.0, %v375
        %377 = vdwg.mxu0
        %v378 = vadd.f32 %v303, %v305
        %v379 = vadd.f32 %v378, %v374
        %v380 = vadd.f32 %v379, %v376
        %381 = vadd.xlane.f32.xlu0 %v380
        %v382 = vpop.xlane.xlu0 %381
        %v383 = vmul.f32 %v303, %v303
        %v384 = vmul.f32 %v305, %v305
        %v385 = vmul.f32 %v374, %v374
        %v386 = vmul.f32 %v376, %v376
        %v387 = vadd.f32 %v383, %v384
        %v388 = vadd.f32 %v387, %v385
        %v389 = vadd.f32 %v388, %v386
        %390 = vadd.xlane.f32.xlu0 %v389
        %v391 = vpop.xlane.xlu0 %390
        %vm392 = vcmask 7168
        %v393 = vsel %vm392, %v382, %v391
        %vm394 = vcmask 15360
        %395 = vst.msk [vmem:[%s212] sm:$0xff] %vm394, %v393
        %396 = vst [vmem:[%s205] sm:$0xff] %v303
        %397 = vst [vmem:[%s205 + $0x8] sm:$0xff] %v305
        %398 = vst [vmem:[%s205 + $0x10] sm:$0xff] %v374
        %399 = vst [vmem:[%s205 + $0x18] sm:$0xff] %v376
        %s400 = sand.u32 %s80, 1
        %s401 = scalar_lea.sflag [#allocation4], %s400
        %s402 = sand.u32 %s80, 1
        %s403 = smul.addr %s402, 32
        %s404 = scalar_lea.vmem [#allocation7], %s403
        %s405 = sand.u32 %s106, 1
        %s406 = scalar_lea.sflag [#allocation9], %s405
        %s407 = sand.u32 %s106, 1
        %s408 = smul.addr %s407, 8
        %s409 = scalar_lea.vmem [#allocation8], %s408
        // Predicated region
        $region37: #{bottleneck_forward.4} parent=27 // pred_check
          %p410 = pneg %p90
        $region38: #{bottleneck_forward.4} parent=27 // pred_check_branch
          %412 = sbr.rel (%p410) target = $region40
        $region39: #{bottleneck_forward.4} parent=27 // pred_region
          %s413 = smul.u32 4, %s25
          %s415 = ssub.s32 512, 512
          %416 = vsyncadd %s401, %s415
          %s417 = smul.addr %s413, 128
          %s418 = scalar_lea.hbm %s2, %s417
          %s420 = sshll.u32 %s404, 4
          %s421 = int_to_ptr.vmem [resolvable:$true] %s420
          %423 = dma.vmem_to_hbm [thread:$0]  %s421, 512, %s418, %s401
        $region40: #{bottleneck_forward.4} parent=27 // pred_fallthru
          _
        // Predicated region
        $region41: #{bottleneck_forward.4} parent=27 // pred_check
          %p424 = pneg %p116
        $region42: #{bottleneck_forward.4} parent=27 // pred_check_branch
          %426 = sbr.rel (%p424) target = $region44
        $region43: #{bottleneck_forward.4} parent=27 // pred_region
          %s428 = ssub.s32 128, 128
          %429 = vsyncadd %s406, %s428
          %s430 = smul.addr %s25, 128
          %s431 = scalar_lea.hbm %s3, %s430
          %s433 = sshll.u32 %s409, 4
          %s434 = int_to_ptr.vmem [resolvable:$true] %s433
          %436 = dma.vmem_to_hbm [thread:$0]  %s434, 128, %s431, %s406
        $region44: #{bottleneck_forward.4} parent=27 // pred_fallthru
          _
      $region28: #{bottleneck_forward.4} parent=5 // pred_fallthru
        _
      %p437 = scmp.le.s32.totalorder 2, %s20
      // Predicated region
      $region45: #{bottleneck_forward.4} parent=5 // pred_check
        %p438 = pneg %p437
      $region46: #{bottleneck_forward.4} parent=5 // pred_check_branch
        %440 = sbr.rel (%p438) target = $region48
      $region47: #{bottleneck_forward.4} parent=5 // pred_region
        %s441 = ssub.s32 %s20, 2
        // Predicated region
        $region49: #{bottleneck_forward.4} parent=47 // pred_check
          %p442 = pneg %p96
        $region50: #{bottleneck_forward.4} parent=47 // pred_check_branch
          %444 = sbr.rel (%p442) target = $region52
        $region51: #{bottleneck_forward.4} parent=47 // pred_region
          %s445 = sand.u32 %s81, 1
          %s446 = scalar_lea.sflag [#allocation4], %s445
          %s447 = sand.u32 %s81, 1
          %s448 = smul.addr %s447, 32
          %s449 = scalar_lea.vmem [#allocation7], %s448
          %450 = dma.done %s446, 512
        $region52: #{bottleneck_forward.4} parent=47 // pred_fallthru
          _
        // Predicated region
        $region53: #{bottleneck_forward.4} parent=47 // pred_check
          %p451 = pneg %p122
        $region54: #{bottleneck_forward.4} parent=47 // pred_check_branch
          %453 = sbr.rel (%p451) target = $region56
        $region55: #{bottleneck_forward.4} parent=47 // pred_region
          %s454 = sand.u32 %s107, 1
          %s455 = scalar_lea.sflag [#allocation9], %s454
          %s456 = sand.u32 %s107, 1
          %s457 = smul.addr %s456, 8
          %s458 = scalar_lea.vmem [#allocation8], %s457
          %459 = dma.done %s455, 128
        $region56: #{bottleneck_forward.4} parent=47 // pred_fallthru
          _
      $region48: #{bottleneck_forward.4} parent=5 // pred_fallthru
        _
    $region6: #{bottleneck_forward.4} parent=1 // loop_footer
      %s24 = sadd.s32 1, %s20
    $region7: #{bottleneck_forward.4} parent=1 // loop_footer_branch
      %19 = sbr.rel target = $region3
    $region8: #{bottleneck_forward.4} parent=1 // loop_exit
      _
    %460 = vsyncpa [#allocation3], 1
    %s461 = scalar_lea.sflag [#allocation3], 1
    %462 = vsyncpa %s461, 1
    %463 = vsyncpa [#allocation6], 1
    %464 = vsyncpa [#allocation4], 1
    %s465 = scalar_lea.sflag [#allocation4], 1
    %466 = vsyncpa %s465, 1
    %467 = vsyncpa [#allocation9], 1
    %s468 = scalar_lea.sflag [#allocation9], 1
    %469 = vsyncpa %s468, 1

// kernel: bottleneck_forward.6
$region0: #{bottleneck_forward.6}
  #allocation0 [shape = 'u32[]', space=smem, size = 0x4, offset = 0x4, fixed_abs, tag = 'smem constant byte address 0x4 - core index']
  #allocation1 [shape = 'u32[144,128]{1,0:T(1,128)}', space=vmem, size = 0x12000, scoped, tag = 'internal scratch']
  %s0 = inlined_call_operand.hbm [shape: f32[8,4], index: 0, kind: input, shape index: {}]
  %s1 = inlined_call_operand.hbm [shape: f32[8,1024], index: 1, kind: input, shape index: {}]
  %s2 = inlined_call_operand.hbm [shape: f32[32,8], index: 2, kind: input, shape index: {}]
  %s3 = inlined_call_operand.hbm [shape: f32[32,1024], index: 3, kind: output, shape index: {0}]
  %s4 = inlined_call_operand.hbm [shape: f32[2,32,2], index: 4, kind: output, shape index: {1}]
  %5 = xla_tuple %s3, %s4
  %s6 = sld [smem:[#allocation0]]
  $region65: #{bottleneck_forward.6} parent=0
    _
  %s8 = ssub.s32 1, %s6
  %s9 = scalar_select 0, %s8, %s6
  $region1: #{bottleneck_forward.6} parent=0
    #allocation2 [shape = 'u8[4096]{0}', space=vmem, size = 0x1000, scoped, tag = 'input window, operand 0, single buffered']
    #allocation3 [shape = 's32[2]{0}', space=sflag, size = 0x8, scoped, tag = 'scoped memory for bottleneck_forward.6']
    #allocation4 [shape = 's32[2]{0}', space=sflag, size = 0x8, scoped, tag = 'scoped memory for bottleneck_forward.6']
    #allocation5 [shape = 'u8[32768]{0}', space=vmem, size = 0x8000, scoped, tag = 'input window, operand 1']
    #allocation6 [shape = 's32[2]{0}', space=sflag, size = 0x8, scoped, tag = 'scoped memory for bottleneck_forward.6']
    #allocation7 [shape = 'u8[16384]{0}', space=vmem, size = 0x4000, scoped, tag = 'input window, operand 2, single buffered']
    #allocation8 [shape = 'u8[131072]{0}', space=vmem, size = 0x20000, scoped, tag = 'output window, operand 0']
    #allocation9 [shape = 'u8[32768]{0}', space=vmem, size = 0x8000, scoped, tag = 'output window, operand 1']
    #allocation10 [shape = 's32[2]{0}', space=sflag, size = 0x8, scoped, tag = 'scoped memory for bottleneck_forward.6']
    %10 = vsyncpa [#allocation3], 0
    %11 = vsyncpa [#allocation6], 0
    %s12 = scalar_lea.sflag [#allocation6], 1
    %13 = vsyncpa %s12, 0
    %14 = vsyncpa [#allocation4], 0
    %s15 = scalar_lea.sflag [#allocation4], 1
    %16 = vsyncpa %s15, 0
    %17 = vsyncpa [#allocation10], 0
    %s18 = scalar_lea.sflag [#allocation10], 1
    %19 = vsyncpa %s18, 0
    loop: start=0, step=1, limit=4
    $region2: #{bottleneck_forward.6} parent=1 // loop_pre_header
      _
    $region3: #{bottleneck_forward.6} parent=1 // loop_header
      %s21 = sphi 0, %s25
      %p22 = scmp.ge.s32.totalorder %s21, 4
      %s29 = sphi 0, %s29
      %s31 = sphi 0, %s29
      %s32 = sphi 0, %s31
      %s46 = sphi 0, %s32
      %s52 = sphi 0, %s54
      %s55 = sphi 0, %s52
      %s56 = sphi 0, %s55
      %s72 = sphi 0, %s56
      %s76 = sphi 0, %s76
      %s78 = sphi 0, %s76
      %s79 = sphi 0, %s78
      %s93 = sphi 0, %s79
      %s99 = sphi 0, %s101
      %s102 = sphi 0, %s99
      %s103 = sphi 0, %s102
      %s119 = sphi 0, %s103
      %s125 = sphi 0, %s127
      %s128 = sphi 0, %s125
      %s129 = sphi 0, %s128
      %s145 = sphi 0, %s129
    $region4: #{bottleneck_forward.6} parent=1 // loop_header_branch
      %24 = sbr.rel (%p22) target = $region8
    $region5: #{bottleneck_forward.6} parent=1 // loop_body
      %s26 = ssub.s32 %s21, 1
      %s27 = ssub.s32 %s21, 2
      %s28 = sadd.s32 %s21, 1
      %s30 = sadd.s32 %s29, 1
      %p33 = scmp.eq.s32.totalorder %s21, 1
      %p34 = scmp.ne.s32.totalorder %s29, %s31
      %p35 = scmp.eq.s32.totalorder %s21, 0
      %p36 = por %p34, %p35
      %p37 = scmp.ne.s32.totalorder %s29, %s31
      %p38 = scmp.eq.s32.totalorder %s26, 1
      %p39 = por %p37, %p38
      %p40 = scmp.ne.s32.totalorder %s31, %s32
      %p41 = scmp.eq.s32.totalorder %s26, 0
      %p42 = por %p40, %p41
      %p43 = scmp.ne.s32.totalorder %s31, %s32
      %p44 = scmp.eq.s32.totalorder %s27, 1
      %p45 = por %p43, %p44
      %p47 = scmp.ne.s32.totalorder %s32, %s46
      %p48 = scmp.eq.s32.totalorder %s27, 0
      %p49 = por %p47, %p48
      %s50 = ssub.s32 %s21, %s28
      %p51 = scmp.eq.s32.totalorder %s50, 0
      %s53 = sadd.s32 %s52, 1
      %s54 = scalar_select %p51, %s52, %s53
      %p57 = pneg %p51
      %p58 = scmp.eq.s32.totalorder %s21, 1
      %p59 = por %p57, %p58
      %p60 = scmp.ne.s32.totalorder %s52, %s55
      %p61 = scmp.eq.s32.totalorder %s21, 0
      %p62 = por %p60, %p61
      %p63 = scmp.ne.s32.totalorder %s52, %s55
      %p64 = scmp.eq.s32.totalorder %s26, 1
      %p65 = por %p63, %p64
      %p66 = scmp.ne.s32.totalorder %s55, %s56
      %p67 = scmp.eq.s32.totalorder %s26, 0
      %p68 = por %p66, %p67
      %p69 = scmp.ne.s32.totalorder %s55, %s56
      %p70 = scmp.eq.s32.totalorder %s27, 1
      %p71 = por %p69, %p70
      %p73 = scmp.ne.s32.totalorder %s56, %s72
      %p74 = scmp.eq.s32.totalorder %s27, 0
      %p75 = por %p73, %p74
      %s77 = sadd.s32 %s76, 1
      %p80 = scmp.eq.s32.totalorder %s21, 1
      %p81 = scmp.ne.s32.totalorder %s76, %s78
      %p82 = scmp.eq.s32.totalorder %s21, 0
      %p83 = por %p81, %p82
      %p84 = scmp.ne.s32.totalorder %s76, %s78
      %p85 = scmp.eq.s32.totalorder %s26, 1
      %p86 = por %p84, %p85
      %p87 = scmp.ne.s32.totalorder %s78, %s79
      %p88 = scmp.eq.s32.totalorder %s26, 0
      %p89 = por %p87, %p88
      %p90 = scmp.ne.s32.totalorder %s78, %s79
      %p91 = scmp.eq.s32.totalorder %s27, 1
      %p92 = por %p90, %p91
      %p94 = scmp.ne.s32.totalorder %s79, %s93
      %p95 = scmp.eq.s32.totalorder %s27, 0
      %p96 = por %p94, %p95
      %s97 = ssub.s32 %s21, %s28
      %p98 = scmp.eq.s32.totalorder %s97, 0
      %s100 = sadd.s32 %s99, 1
      %s101 = scalar_select %p98, %s99, %s100
      %p104 = pneg %p98
      %p105 = scmp.eq.s32.totalorder %s21, 1
      %p106 = por %p104, %p105
      %p107 = scmp.ne.s32.totalorder %s99, %s102
      %p108 = scmp.eq.s32.totalorder %s21, 0
      %p109 = por %p107, %p108
      %p110 = scmp.ne.s32.totalorder %s99, %s102
      %p111 = scmp.eq.s32.totalorder %s26, 1
      %p112 = por %p110, %p111
      %p113 = scmp.ne.s32.totalorder %s102, %s103
      %p114 = scmp.eq.s32.totalorder %s26, 0
      %p115 = por %p113, %p114
      %p116 = scmp.ne.s32.totalorder %s102, %s103
      %p117 = scmp.eq.s32.totalorder %s27, 1
      %p118 = por %p116, %p117
      %p120 = scmp.ne.s32.totalorder %s103, %s119
      %p121 = scmp.eq.s32.totalorder %s27, 0
      %p122 = por %p120, %p121
      %s123 = ssub.s32 %s21, %s28
      %p124 = scmp.eq.s32.totalorder %s123, 0
      %s126 = sadd.s32 %s125, 1
      %s127 = scalar_select %p124, %s125, %s126
      %p130 = pneg %p124
      %p131 = scmp.eq.s32.totalorder %s21, 1
      %p132 = por %p130, %p131
      %p133 = scmp.ne.s32.totalorder %s125, %s128
      %p134 = scmp.eq.s32.totalorder %s21, 0
      %p135 = por %p133, %p134
      %p136 = scmp.ne.s32.totalorder %s125, %s128
      %p137 = scmp.eq.s32.totalorder %s26, 1
      %p138 = por %p136, %p137
      %p139 = scmp.ne.s32.totalorder %s128, %s129
      %p140 = scmp.eq.s32.totalorder %s26, 0
      %p141 = por %p139, %p140
      %p142 = scmp.ne.s32.totalorder %s128, %s129
      %p143 = scmp.eq.s32.totalorder %s27, 1
      %p144 = por %p142, %p143
      %p146 = scmp.ne.s32.totalorder %s129, %s145
      %p147 = scmp.eq.s32.totalorder %s27, 0
      %p148 = por %p146, %p147
      %p149 = scmp.le.s32.totalorder 1, %s21
      %p150 = scmp.lt.s32.totalorder %s21, 3
      %p151 = pnand %p149, %p150
      %p152 = pneg %p151
      // Predicated region
      $region9: #{bottleneck_forward.6} parent=5 // pred_check
        _
      $region10: #{bottleneck_forward.6} parent=5 // pred_check_branch
        %154 = sbr.rel (%p151) target = $region12
      $region11: #{bottleneck_forward.6} parent=5 // pred_region
        %s155 = ssub.s32 %s21, 1
        // Predicated region
        $region13: #{bottleneck_forward.6} parent=11 // pred_check
          %p156 = pneg %p42
        $region14: #{bottleneck_forward.6} parent=11 // pred_check_branch
          %158 = sbr.rel (%p156) target = $region16
        $region15: #{bottleneck_forward.6} parent=11 // pred_region
          %s160 = ssub.s32 128, 128
          %161 = vsyncadd [#allocation3], %s160
          %s163 = sshll.u32 [#allocation2], 4
          %s164 = int_to_ptr.vmem [resolvable:$true] %s163
          %166 = dma.hbm_to_vmem [thread:$0]  %s0, 128, %s164, [#allocation3]
        $region16: #{bottleneck_forward.6} parent=11 // pred_fallthru
          _
        // Predicated region
        $region17: #{bottleneck_forward.6} parent=11 // pred_check
          %p167 = pneg %p89
        $region18: #{bottleneck_forward.6} parent=11 // pred_check_branch
          %169 = sbr.rel (%p167) target = $region20
        $region19: #{bottleneck_forward.6} parent=11 // pred_region
          %s171 = ssub.s32 512, 512
          %172 = vsyncadd [#allocation6], %s171
          %s173 = sshll.u32 [#allocation7], 4
          %s174 = int_to_ptr.vmem [resolvable:$true] %s173
          %179 = dma.hbm_to_vmem [thread:$0]  %s2, 512, %s174, [#allocation6], 128, 128, 8
        $region20: #{bottleneck_forward.6} parent=11 // pred_fallthru
          _
      $region12: #{bottleneck_forward.6} parent=5 // pred_fallthru
        _
      %p180 = scmp.lt.s32.totalorder %s21, 2
      // Predicated region
      $region21: #{bottleneck_forward.6} parent=5 // pred_check
        %p181 = pneg %p180
      $region22: #{bottleneck_forward.6} parent=5 // pred_check_branch
        %183 = sbr.rel (%p181) target = $region24
      $region23: #{bottleneck_forward.6} parent=5 // pred_region
        // Predicated region
        $region25: #{bottleneck_forward.6} parent=23 // pred_check
          %p184 = pneg %p62
        $region26: #{bottleneck_forward.6} parent=23 // pred_check_branch
          %186 = sbr.rel (%p184) target = $region28
        $region27: #{bottleneck_forward.6} parent=23 // pred_region
          %s187 = sand.u32 %s21, 1
          %s188 = scalar_lea.sflag [#allocation6], %s187
          %s189 = sand.u32 %s52, 1
          %s190 = smul.addr %s189, 32
          %s191 = scalar_lea.vmem [#allocation5], %s190
          %s192 = smul.u32 4, %s21
          %s194 = ssub.s32 512, 512
          %195 = vsyncadd %s188, %s194
          %s196 = smul.addr %s192, 128
          %s197 = scalar_lea.hbm %s1, %s196
          %s199 = sshll.u32 %s191, 4
          %s200 = int_to_ptr.vmem [resolvable:$true] %s199
          %202 = dma.hbm_to_vmem [thread:$0]  %s197, 512, %s200, %s188
        $region28: #{bottleneck_forward.6} parent=23 // pred_fallthru
          _
      $region24: #{bottleneck_forward.6} parent=5 // pred_fallthru
        _
      %p203 = scmp.le.s32.totalorder 1, %s21
      %p204 = scmp.lt.s32.totalorder %s21, 3
      %p205 = pnand %p203, %p204
      %p206 = pneg %p205
      // Predicated region
      $region29: #{bottleneck_forward.6} parent=5 // pred_check
        _
      $region30: #{bottleneck_forward.6} parent=5 // pred_check_branch
        %208 = sbr.rel (%p205) target = $region32
      $region31: #{bottleneck_forward.6} parent=5 // pred_region
        %s209 = ssub.s32 %s21, 1
        // Predicated region
        $region33: #{bottleneck_forward.6} parent=31 // pred_check
          %p210 = pneg %p42
        $region34: #{bottleneck_forward.6} parent=31 // pred_check_branch
          %212 = sbr.rel (%p210) target = $region36
        $region35: #{bottleneck_forward.6} parent=31 // pred_region
          %213 = dma.done [#allocation3], 128
        $region36: #{bottleneck_forward.6} parent=31 // pred_fallthru
          _
        %s214 = sand.u32 %s26, 1
        %s215 = scalar_lea.sflag [#allocation6], %s214
        %s216 = sand.u32 %s55, 1
        %s217 = smul.addr %s216, 32
        %s218 = scalar_lea.vmem [#allocation5], %s217
        // Predicated region
        $region37: #{bottleneck_forward.6} parent=31 // pred_check
          %p219 = pneg %p68
        $region38: #{bottleneck_forward.6} parent=31 // pred_check_branch
          %221 = sbr.rel (%p219) target = $region40
        $region39: #{bottleneck_forward.6} parent=31 // pred_region
          %222 = dma.done %s215, 512
        $region40: #{bottleneck_forward.6} parent=31 // pred_fallthru
          _
        // Predicated region
        $region41: #{bottleneck_forward.6} parent=31 // pred_check
          %p223 = pneg %p89
        $region42: #{bottleneck_forward.6} parent=31 // pred_check_branch
          %225 = sbr.rel (%p223) target = $region44
        $region43: #{bottleneck_forward.6} parent=31 // pred_region
          %226 = dma.done [#allocation6], 512
        $region44: #{bottleneck_forward.6} parent=31 // pred_fallthru
          _
        %p227 = pneg %p42
        %p228 = pneg %p39
        %s229 = sand.u32 %s26, 1
        %s230 = scalar_lea.sflag [#allocation6], %s229
        %s231 = sand.u32 %s55, 1
        %s232 = smul.addr %s231, 32
        %s233 = scalar_lea.vmem [#allocation5], %s232
        %p234 = pneg %p68
        %p235 = pneg %p65
        %p236 = pneg %p89
        %p237 = pneg %p86
        %p238 = pneg %p115
        %p239 = pneg %p112
        %s240 = sand.u32 %s102, 1
        %s241 = scalar_lea.sflag [#allocation4], %s240
        %s242 = sand.u32 %s102, 1
        %s243 = smul.addr %s242, 128
        %s244 = scalar_lea.vmem [#allocation8], %s243
        %p245 = pneg %p141
        %p246 = pneg %p138
        %s247 = sand.u32 %s128, 1
        %s248 = scalar_lea.sflag [#allocation10], %s247
        %s249 = sand.u32 %s128, 1
        %s250 = smul.addr %s249, 32
        %s251 = scalar_lea.vmem [#allocation9], %s250
        %s252 = smul.u32 4, %s26
        %s253 = smul.u32 4, %s26
        %v254 = vld [vmem:[#allocation2] sm:$0xff]
        %v255 = vmul.f32 %v254, 0.0009765625
        %v256 = vmul.f32 %v255, %v255
        %258 = vrot.lane.b32.xlu0 %v256, 1
        %v259 = vpop.permute.xlu0 %258
        %v261 = vsub.f32 %v255, %v259
        %v262 = vmax.f32 %v261, 0.0
        %v263 = vadd.f32 %v262, 1e-05
        %v264 = vrsqrt.pop %v263
        %266 = vrot.lane.b32.xlu0 %v264, 125
        %v267 = vpop.permute.xlu0 %266
        %v269 = vmul.f32 %v254, %v267
        %271 = vrot.lane.b32.xlu0 %v269, 2
        %v272 = vpop.permute.xlu0 %271
        %v274 = vmul.f32 %v255, %v272
        %276 = vrot.lane.b32.xlu0 %v274, 127
        %v277 = vpop.permute.xlu0 %276
        %v279 = vsub.f32 %v254, %v277
        %v280 = vld [vmem:[%s218] sm:$0xff]
        %v281 = vld [vmem:[%s218 + $0x8] sm:$0xff]
        %v282 = vld [vmem:[%s218 + $0x10] sm:$0xff]
        %v283 = vld [vmem:[%s218 + $0x18] sm:$0xff]
        %284 = vset.pattern.permute.xlu0 0
        %285 = vperm.xlu0 %284, %v269
        %v286 = vpop.permute.xlu0 %285
        %v288 = vmul.f32 %v280, %v286
        %v289 = vmul.f32 %v281, %v286
        %v290 = vmul.f32 %v282, %v286
        %v291 = vmul.f32 %v283, %v286
        %293 = vset.pattern.permute.xlu0 1
        %294 = vperm.xlu0 %293, %v279
        %v295 = vpop.permute.xlu0 %294
        %v297 = vadd.f32 %v288, %v295
        %v298 = vadd.f32 %v289, %v295
        %v299 = vadd.f32 %v290, %v295
        %v300 = vadd.f32 %v291, %v295
        %v301 = vmax.f32 %v297, 0.0
        %v302 = vmax.f32 %v298, 0.0
        %v303 = vmax.f32 %v299, 0.0
        %v304 = vmax.f32 %v300, 0.0
        %v305 = vld [vmem:[#allocation7] sm:$0xff]
        %v306 = vld [vmem:[#allocation7 + $0x8] sm:$0xff]
        %v307 = vld [vmem:[#allocation7 + $0x10] sm:$0xff]
        %v308 = vld [vmem:[#allocation7 + $0x18] sm:$0xff]
        %vm309 = vcmask 64512
        %v311 = vsel %vm309, %v305, 0
        %v314 = vsel %vm309, %v306, 0
        %v317 = vsel %vm309, %v307, 0
        %v320 = vsel %vm309, %v308, 0
        %322 = vmatprep.subr.mxu0 %v302
        %323 = vmatpush1.msra.mxu0 %v301
        %324 = vmatprep.subr.mxu0 0.0
        %325 = vmatpush1.msra.mxu0 0.0
        %326 = vmatprep.subr.mxu0 0.0
        %327 = vmatpush1.msra.mxu0 0.0
        %328 = vmatprep.subr.mxu0 0.0
        %329 = vmatpush1.msra.mxu0 0.0
        %330 = vmatprep.subr.mxu0 0.0
        %331 = vmatpush1.msra.mxu0 0.0
        %332 = vmatprep.subr.mxu0 0.0
        %333 = vmatpush1.msra.mxu0 0.0
        %334 = vmatprep.subr.mxu0 0.0
        %335 = vmatpush1.msra.mxu0 0.0
        %336 = vmatprep.subr.mxu0 0.0
        %337 = vmatpush1.msra.mxu0 0.0
        %338 = vmatprep.subr.mxu0 0.0
        %339 = vmatpush1.msra.mxu0 0.0
        %340 = vmatprep.subr.mxu0 0.0
        %341 = vmatpush1.msra.mxu0 0.0
        %342 = vmatprep.subr.mxu0 0.0
        %343 = vmatpush1.msra.mxu0 0.0
        %344 = vmatprep.subr.mxu0 0.0
        %345 = vmatpush1.msra.mxu0 0.0
        %346 = vmatprep.subr.mxu0 0.0
        %347 = vmatpush1.msra.mxu0 0.0
        %348 = vmatprep.subr.mxu0 0.0
        %349 = vmatpush1.msra.mxu0 0.0
        %350 = vmatprep.subr.mxu0 0.0
        %351 = vmatpush1.msra.mxu0 0.0
        %352 = vmatprep.subr.mxu0 0.0
        %353 = vmatpush1.msra.mxu0 0.0
        %354 = vmatprep.subr.mxu0 0.0
        %355 = vmatpush1.msra.mxu0 0.0
        %356 = vmatprep.subr.mxu0 0.0
        %357 = vmatpush1.msra.mxu0 0.0
        %358 = vmatprep.subr.mxu0 0.0
        %359 = vmatpush1.msra.mxu0 0.0
        %360 = vmatprep.subr.mxu0 0.0
        %361 = vmatpush1.msra.mxu0 0.0
        %362 = vmatprep.subr.mxu0 0.0
        %363 = vmatpush1.msra.mxu0 0.0
        %364 = vmatprep.subr.mxu0 0.0
        %365 = vmatpush1.msra.mxu0 0.0
        %366 = vmatprep.subr.mxu0 0.0
        %367 = vmatpush1.msra.mxu0 0.0
        %368 = vmatprep.subr.mxu0 0.0
        %369 = vmatpush1.msra.mxu0 0.0
        %370 = vmatprep.subr.mxu0 0.0
        %371 = vmatpush1.msra.mxu0 0.0
        %372 = vmatprep.subr.mxu0 0.0
        %373 = vmatpush1.msra.mxu0 0.0
        %374 = vmatprep.subr.mxu0 0.0
        %375 = vmatpush1.msra.mxu0 0.0
        %376 = vmatprep.subr.mxu0 0.0
        %377 = vmatpush1.msra.mxu0 0.0
        %378 = vmatprep.subr.mxu0 0.0
        %379 = vmatpush1.msra.mxu0 0.0
        %380 = vmatprep.subr.mxu0 0.0
        %381 = vmatpush1.msra.mxu0 0.0
        %382 = vmatprep.subr.mxu0 0.0
        %383 = vmatpush1.msra.mxu0 0.0
        %384 = vmatprep.subr.mxu0 0.0
        %385 = vmatpush1.msra.mxu0 0.0
        %386 = vmatprep.mubr.f32.mxu0 0.0
        %387 = vmatmul.mubr.f32.gmra.mrb[0].mxu0 %v311
        %v388 = vpop.f32.mrb[0].mxu0
        %v389 = vadd.f32 0.0, %v388
        %v390 = vpop.f32.mrb[0].mxu0
        %v391 = vadd.f32 0.0, %v390
        %392 = vmatprep.mubr.f32.mxu0 0.0
        %393 = vmatmul.mubr.f32.gmra.mrb[0].mxu0 %v314
        %v394 = vpop.f32.mrb[0].mxu0
        %v395 = vadd.f32 0.0, %v394
        %v396 = vpop.f32.mrb[0].mxu0
        %v397 = vadd.f32 0.0, %v396
        %398 = vmatprep.mubr.f32.mxu0 0.0
        %399 = vmatmul.mubr.f32.gmra.mrb[0].mxu0 %v317
        %v400 = vpop.f32.mrb[0].mxu0
        %v401 = vadd.f32 0.0, %v400
        %v402 = vpop.f32.mrb[0].mxu0
        %v403 = vadd.f32 0.0, %v402
        %404 = vmatprep.mubr.f32.mxu0 0.0
        %405 = vmatmul.mubr.f32.gmra.mrb[0].mxu0 %v320
        %v406 = vpop.f32.mrb[0].mxu0
        %v407 = vadd.f32 0.0, %v406
        %v408 = vpop.f32.mrb[0].mxu0
        %v409 = vadd.f32 0.0, %v408
        %410 = vdwg.mxu0
        %411 = vmatprep.subr.mxu0 %v304
        %412 = vmatpush1.msra.mxu0 %v303
        %413 = vmatprep.subr.mxu0 0.0
        %414 = vmatpush1.msra.mxu0 0.0
        %415 = vmatprep.subr.mxu0 0.0
        %416 = vmatpush1.msra.mxu0 0.0
        %417 = vmatprep.subr.mxu0 0.0
        %418 = vmatpush1.msra.mxu0 0.0
        %419 = vmatprep.subr.mxu0 0.0
        %420 = vmatpush1.msra.mxu0 0.0
        %421 = vmatprep.subr.mxu0 0.0
        %422 = vmatpush1.msra.mxu0 0.0
        %423 = vmatprep.subr.mxu0 0.0
        %424 = vmatpush1.msra.mxu0 0.0
        %425 = vmatprep.subr.mxu0 0.0
        %426 = vmatpush1.msra.mxu0 0.0
        %427 = vmatprep.subr.mxu0 0.0
        %428 = vmatpush1.msra.mxu0 0.0
        %429 = vmatprep.subr.mxu0 0.0
        %430 = vmatpush1.msra.mxu0 0.0
        %431 = vmatprep.subr.mxu0 0.0
        %432 = vmatpush1.msra.mxu0 0.0
        %433 = vmatprep.subr.mxu0 0.0
        %434 = vmatpush1.msra.mxu0 0.0
        %435 = vmatprep.subr.mxu0 0.0
        %436 = vmatpush1.msra.mxu0 0.0
        %437 = vmatprep.subr.mxu0 0.0
        %438 = vmatpush1.msra.mxu0 0.0
        %439 = vmatprep.subr.mxu0 0.0
        %440 = vmatpush1.msra.mxu0 0.0
        %441 = vmatprep.subr.mxu0 0.0
        %442 = vmatpush1.msra.mxu0 0.0
        %443 = vmatprep.subr.mxu0 0.0
        %444 = vmatpush1.msra.mxu0 0.0
        %445 = vmatprep.subr.mxu0 0.0
        %446 = vmatpush1.msra.mxu0 0.0
        %447 = vmatprep.subr.mxu0 0.0
        %448 = vmatpush1.msra.mxu0 0.0
        %449 = vmatprep.subr.mxu0 0.0
        %450 = vmatpush1.msra.mxu0 0.0
        %451 = vmatprep.subr.mxu0 0.0
        %452 = vmatpush1.msra.mxu0 0.0
        %453 = vmatprep.subr.mxu0 0.0
        %454 = vmatpush1.msra.mxu0 0.0
        %455 = vmatprep.subr.mxu0 0.0
        %456 = vmatpush1.msra.mxu0 0.0
        %457 = vmatprep.subr.mxu0 0.0
        %458 = vmatpush1.msra.mxu0 0.0
        %459 = vmatprep.subr.mxu0 0.0
        %460 = vmatpush1.msra.mxu0 0.0
        %461 = vmatprep.subr.mxu0 0.0
        %462 = vmatpush1.msra.mxu0 0.0
        %463 = vmatprep.subr.mxu0 0.0
        %464 = vmatpush1.msra.mxu0 0.0
        %465 = vmatprep.subr.mxu0 0.0
        %466 = vmatpush1.msra.mxu0 0.0
        %467 = vmatprep.subr.mxu0 0.0
        %468 = vmatpush1.msra.mxu0 0.0
        %469 = vmatprep.subr.mxu0 0.0
        %470 = vmatpush1.msra.mxu0 0.0
        %471 = vmatprep.subr.mxu0 0.0
        %472 = vmatpush1.msra.mxu0 0.0
        %473 = vmatprep.subr.mxu0 0.0
        %474 = vmatpush1.msra.mxu0 0.0
        %475 = vmatprep.mubr.f32.mxu0 0.0
        %476 = vmatmul.mubr.f32.gmra.mrb[0].mxu0 %v311
        %v477 = vpop.f32.mrb[0].mxu0
        %v478 = vadd.f32 0.0, %v477
        %v479 = vpop.f32.mrb[0].mxu0
        %v480 = vadd.f32 0.0, %v479
        %481 = vmatprep.mubr.f32.mxu0 0.0
        %482 = vmatmul.mubr.f32.gmra.mrb[0].mxu0 %v314
        %v483 = vpop.f32.mrb[0].mxu0
        %v484 = vadd.f32 0.0, %v483
        %v485 = vpop.f32.mrb[0].mxu0
        %v486 = vadd.f32 0.0, %v485
        %487 = vmatprep.mubr.f32.mxu0 0.0
        %488 = vmatmul.mubr.f32.gmra.mrb[0].mxu0 %v317
        %v489 = vpop.f32.mrb[0].mxu0
        %v490 = vadd.f32 0.0, %v489
        %v491 = vpop.f32.mrb[0].mxu0
        %v492 = vadd.f32 0.0, %v491
        %493 = vmatprep.mubr.f32.mxu0 0.0
        %494 = vmatmul.mubr.f32.gmra.mrb[0].mxu0 %v320
        %v495 = vpop.f32.mrb[0].mxu0
        %v496 = vadd.f32 0.0, %v495
        %v497 = vpop.f32.mrb[0].mxu0
        %v498 = vadd.f32 0.0, %v497
        %499 = vdwg.mxu0
        %v500 = vadd.f32 %v389, %v391
        %v501 = vadd.f32 %v500, %v478
        %v502 = vadd.f32 %v501, %v480
        %503 = vadd.xlane.f32.xlu0 %v502
        %v504 = vpop.xlane.xlu0 %503
        %v505 = vadd.f32 %v395, %v397
        %v506 = vadd.f32 %v505, %v484
        %v507 = vadd.f32 %v506, %v486
        %508 = vadd.xlane.f32.xlu0 %v507
        %v509 = vpop.xlane.xlu0 %508
        %v510 = vadd.f32 %v401, %v403
        %v511 = vadd.f32 %v510, %v490
        %v512 = vadd.f32 %v511, %v492
        %513 = vadd.xlane.f32.xlu0 %v512
        %v514 = vpop.xlane.xlu0 %513
        %v515 = vadd.f32 %v407, %v409
        %v516 = vadd.f32 %v515, %v496
        %v517 = vadd.f32 %v516, %v498
        %518 = vadd.xlane.f32.xlu0 %v517
        %v519 = vpop.xlane.xlu0 %518
        %v520 = vmul.f32 %v389, %v389
        %v521 = vmul.f32 %v391, %v391
        %v522 = vmul.f32 %v478, %v478
        %v523 = vmul.f32 %v480, %v480
        %v524 = vmul.f32 %v395, %v395
        %v525 = vmul.f32 %v397, %v397
        %v526 = vmul.f32 %v484, %v484
        %v527 = vmul.f32 %v486, %v486
        %v528 = vmul.f32 %v401, %v401
        %v529 = vmul.f32 %v403, %v403
        %v530 = vmul.f32 %v490, %v490
        %v531 = vmul.f32 %v492, %v492
        %v532 = vmul.f32 %v407, %v407
        %v533 = vmul.f32 %v409, %v409
        %v534 = vmul.f32 %v496, %v496
        %v535 = vmul.f32 %v498, %v498
        %v536 = vadd.f32 %v520, %v521
        %v537 = vadd.f32 %v536, %v522
        %v538 = vadd.f32 %v537, %v523
        %539 = vadd.xlane.f32.xlu0 %v538
        %v540 = vpop.xlane.xlu0 %539
        %v541 = vadd.f32 %v524, %v525
        %v542 = vadd.f32 %v541, %v526
        %v543 = vadd.f32 %v542, %v527
        %544 = vadd.xlane.f32.xlu0 %v543
        %v545 = vpop.xlane.xlu0 %544
        %v546 = vadd.f32 %v528, %v529
        %v547 = vadd.f32 %v546, %v530
        %v548 = vadd.f32 %v547, %v531
        %549 = vadd.xlane.f32.xlu0 %v548
        %v550 = vpop.xlane.xlu0 %549
        %v551 = vadd.f32 %v532, %v533
        %v552 = vadd.f32 %v551, %v534
        %v553 = vadd.f32 %v552, %v535
        %554 = vadd.xlane.f32.xlu0 %v553
        %v555 = vpop.xlane.xlu0 %554
        %vm556 = vcmask 7168
        %v557 = vsel %vm556, %v504, %v540
        %v558 = vsel %vm556, %v509, %v545
        %v559 = vsel %vm556, %v514, %v550
        %v560 = vsel %vm556, %v519, %v555
        %vm561 = vcmask 15360
        %562 = vst.msk [vmem:[%s251] sm:$0xff] %vm561, %v557
        %563 = vst.msk [vmem:[%s251 + $0x8] sm:$0xff] %vm561, %v558
        %564 = vst.msk [vmem:[%s251 + $0x10] sm:$0xff] %vm561, %v559
        %565 = vst.msk [vmem:[%s251 + $0x18] sm:$0xff] %vm561, %v560
        %566 = vst [vmem:[%s244] sm:$0xff] %v389
        %567 = vst [vmem:[%s244 + $0x8] sm:$0xff] %v391
        %568 = vst [vmem:[%s244 + $0x10] sm:$0xff] %v478
        %569 = vst [vmem:[%s244 + $0x18] sm:$0xff] %v480
        %570 = vst [vmem:[%s244 + $0x20] sm:$0xff] %v395
        %571 = vst [vmem:[%s244 + $0x28] sm:$0xff] %v397
        %572 = vst [vmem:[%s244 + $0x30] sm:$0xff] %v484
        %573 = vst [vmem:[%s244 + $0x38] sm:$0xff] %v486
        %574 = vst [vmem:[%s244 + $0x40] sm:$0xff] %v401
        %575 = vst [vmem:[%s244 + $0x48] sm:$0xff] %v403
        %576 = vst [vmem:[%s244 + $0x50] sm:$0xff] %v490
        %577 = vst [vmem:[%s244 + $0x58] sm:$0xff] %v492
        %578 = vst [vmem:[%s244 + $0x60] sm:$0xff] %v407
        %579 = vst [vmem:[%s244 + $0x68] sm:$0xff] %v409
        %580 = vst [vmem:[%s244 + $0x70] sm:$0xff] %v496
        %581 = vst [vmem:[%s244 + $0x78] sm:$0xff] %v498
        %s582 = sand.u32 %s102, 1
        %s583 = scalar_lea.sflag [#allocation4], %s582
        %s584 = sand.u32 %s102, 1
        %s585 = smul.addr %s584, 128
        %s586 = scalar_lea.vmem [#allocation8], %s585
        %s587 = sand.u32 %s128, 1
        %s588 = scalar_lea.sflag [#allocation10], %s587
        %s589 = sand.u32 %s128, 1
        %s590 = smul.addr %s589, 32
        %s591 = scalar_lea.vmem [#allocation9], %s590
        // Predicated region
        $region45: #{bottleneck_forward.6} parent=31 // pred_check
          %p592 = pneg %p112
        $region46: #{bottleneck_forward.6} parent=31 // pred_check_branch
          %594 = sbr.rel (%p592) target = $region48
        $region47: #{bottleneck_forward.6} parent=31 // pred_region
          %s595 = smul.u32 4, %s26
          %s597 = ssub.s32 2048, 2048
          %598 = vsyncadd %s583, %s597
          %s599 = smul.addr %s595, 128
          %s600 = scalar_lea.hbm %s3, %s599
          %s601 = sshll.u32 %s586, 4
          %s602 = int_to_ptr.vmem [resolvable:$true] %s601
          %607 = dma.vmem_to_hbm [thread:$0]  %s602, 2048, %s600, %s583, 512, 1024, 32
        $region48: #{bottleneck_forward.6} parent=31 // pred_fallthru
          _
        // Predicated region
        $region49: #{bottleneck_forward.6} parent=31 // pred_check
          %p608 = pneg %p138
        $region50: #{bottleneck_forward.6} parent=31 // pred_check_branch
          %610 = sbr.rel (%p608) target = $region52
        $region51: #{bottleneck_forward.6} parent=31 // pred_region
          %s612 = ssub.s32 512, 512
          %613 = vsyncadd %s588, %s612
          %s614 = smul.addr %s26, 4
          %s615 = smul.addr %s614, 128
          %s616 = scalar_lea.hbm %s4, %s615
          %s617 = sshll.u32 %s591, 4
          %s618 = int_to_ptr.vmem [resolvable:$true] %s617
          %623 = dma.vmem_to_hbm [thread:$0]  %s618, 512, %s616, %s588, 128, 128, 8
        $region52: #{bottleneck_forward.6} parent=31 // pred_fallthru
          _
      $region32: #{bottleneck_forward.6} parent=5 // pred_fallthru
        _
      %p624 = scmp.le.s32.totalorder 2, %s21
      // Predicated region
      $region53: #{bottleneck_forward.6} parent=5 // pred_check
        %p625 = pneg %p624
      $region54: #{bottleneck_forward.6} parent=5 // pred_check_branch
        %627 = sbr.rel (%p625) target = $region56
      $region55: #{bottleneck_forward.6} parent=5 // pred_region
        %s628 = ssub.s32 %s21, 2
        // Predicated region
        $region57: #{bottleneck_forward.6} parent=55 // pred_check
          %p629 = pneg %p118
        $region58: #{bottleneck_forward.6} parent=55 // pred_check_branch
          %631 = sbr.rel (%p629) target = $region60
        $region59: #{bottleneck_forward.6} parent=55 // pred_region
          %s632 = sand.u32 %s103, 1
          %s633 = scalar_lea.sflag [#allocation4], %s632
          %s634 = sand.u32 %s103, 1
          %s635 = smul.addr %s634, 128
          %s636 = scalar_lea.vmem [#allocation8], %s635
          %637 = dma.done %s633, 2048
        $region60: #{bottleneck_forward.6} parent=55 // pred_fallthru
          _
        // Predicated region
        $region61: #{bottleneck_forward.6} parent=55 // pred_check
          %p638 = pneg %p144
        $region62: #{bottleneck_forward.6} parent=55 // pred_check_branch
          %640 = sbr.rel (%p638) target = $region64
        $region63: #{bottleneck_forward.6} parent=55 // pred_region
          %s641 = sand.u32 %s129, 1
          %s642 = scalar_lea.sflag [#allocation10], %s641
          %s643 = sand.u32 %s129, 1
          %s644 = smul.addr %s643, 32
          %s645 = scalar_lea.vmem [#allocation9], %s644
          %646 = dma.done %s642, 512
        $region64: #{bottleneck_forward.6} parent=55 // pred_fallthru
          _
      $region56: #{bottleneck_forward.6} parent=5 // pred_fallthru
        _
    $region6: #{bottleneck_forward.6} parent=1 // loop_footer
      %s25 = sadd.s32 1, %s21
    $region7: #{bottleneck_forward.6} parent=1 // loop_footer_branch
      %20 = sbr.rel target = $region3
    $region8: #{bottleneck_forward.6} parent=1 // loop_exit
      _
    %647 = vsyncpa [#allocation3], 1
    %s648 = scalar_lea.sflag [#allocation3], 1
    %649 = vsyncpa %s648, 1
    %650 = vsyncpa [#allocation6], 1
    %s651 = scalar_lea.sflag [#allocation6], 1
    %652 = vsyncpa %s651, 1
    %653 = vsyncpa [#allocation4], 1
    %s654 = scalar_lea.sflag [#allocation4], 1
    %655 = vsyncpa %s654, 1
    %656 = vsyncpa [#allocation10], 1
    %s657 = scalar_lea.sflag [#allocation10], 1
    %658 = vsyncpa %s657, 1

// kernel: bottleneck_forward.5
$region0: #{bottleneck_forward.5}
  #allocation0 [shape = 'u32[]', space=smem, size = 0x4, offset = 0x4, fixed_abs, tag = 'smem constant byte address 0x4 - core index']
  #allocation1 [shape = 'u32[144,128]{1,0:T(1,128)}', space=vmem, size = 0x12000, scoped, tag = 'internal scratch']
  %s0 = inlined_call_operand.hbm [shape: f32[8,4], index: 0, kind: input, shape index: {}]
  %s1 = inlined_call_operand.hbm [shape: f32[8,1024], index: 1, kind: input, shape index: {}]
  %s2 = inlined_call_operand.hbm [shape: f32[8,72], index: 2, kind: input, shape index: {}]
  %s3 = inlined_call_operand.hbm [shape: f32[9,512], index: 3, kind: input, shape index: {}]
  %s4 = inlined_call_operand.hbm [shape: f32[8,1024], index: 4, kind: output, shape index: {0}]
  %s5 = inlined_call_operand.hbm [shape: f32[2,8,2], index: 5, kind: output, shape index: {1}]
  %6 = xla_tuple %s4, %s5
  %s7 = sld [smem:[#allocation0]]
  $region73: #{bottleneck_forward.5} parent=0
    _
  %s9 = ssub.s32 1, %s7
  %s10 = scalar_select 0, %s9, %s7
  $region1: #{bottleneck_forward.5} parent=0
    #allocation2 [shape = 'u8[4096]{0}', space=vmem, size = 0x1000, scoped, tag = 'input window, operand 0, single buffered']
    #allocation3 [shape = 's32[2]{0}', space=sflag, size = 0x8, scoped, tag = 'scoped memory for bottleneck_forward.5']
    #allocation4 [shape = 's32[2]{0}', space=sflag, size = 0x8, scoped, tag = 'scoped memory for bottleneck_forward.5']
    #allocation5 [shape = 'u8[32768]{0}', space=vmem, size = 0x8000, scoped, tag = 'input window, operand 1']
    #allocation6 [shape = 's32[2]{0}', space=sflag, size = 0x8, scoped, tag = 'scoped memory for bottleneck_forward.5']
    #allocation7 [shape = 'u8[4096]{0}', space=vmem, size = 0x1000, scoped, tag = 'input window, operand 2, single buffered']
    #allocation8 [shape = 'u8[32768]{0}', space=vmem, size = 0x8000, scoped, tag = 'input window, operand 3, single buffered']
    #allocation9 [shape = 's32[1]{0}', space=sflag, size = 0x4, scoped, tag = 'scoped memory for bottleneck_forward.5']
    #allocation10 [shape = 'u8[32768]{0}', space=vmem, size = 0x8000, scoped, tag = 'output window, operand 0']
    #allocation11 [shape = 'u8[8192]{0}', space=vmem, size = 0x2000, scoped, tag = 'output window, operand 1']
    #allocation12 [shape = 's32[2]{0}', space=sflag, size = 0x8, scoped, tag = 'scoped memory for bottleneck_forward.5']
    %11 = vsyncpa [#allocation3], 0
    %12 = vsyncpa [#allocation6], 0
    %s13 = scalar_lea.sflag [#allocation6], 1
    %14 = vsyncpa %s13, 0
    %15 = vsyncpa [#allocation9], 0
    %16 = vsyncpa [#allocation4], 0
    %s17 = scalar_lea.sflag [#allocation4], 1
    %18 = vsyncpa %s17, 0
    %19 = vsyncpa [#allocation12], 0
    %s20 = scalar_lea.sflag [#allocation12], 1
    %21 = vsyncpa %s20, 0
    loop: start=0, step=1, limit=4
    $region2: #{bottleneck_forward.5} parent=1 // loop_pre_header
      _
    $region3: #{bottleneck_forward.5} parent=1 // loop_header
      %s23 = sphi 0, %s27
      %p24 = scmp.ge.s32.totalorder %s23, 4
      %s31 = sphi 0, %s31
      %s33 = sphi 0, %s31
      %s34 = sphi 0, %s33
      %s48 = sphi 0, %s34
      %s54 = sphi 0, %s56
      %s57 = sphi 0, %s54
      %s58 = sphi 0, %s57
      %s74 = sphi 0, %s58
      %s78 = sphi 0, %s78
      %s80 = sphi 0, %s78
      %s81 = sphi 0, %s80
      %s95 = sphi 0, %s81
      %s99 = sphi 0, %s99
      %s101 = sphi 0, %s99
      %s102 = sphi 0, %s101
      %s116 = sphi 0, %s102
      %s122 = sphi 0, %s124
      %s125 = sphi 0, %s122
      %s126 = sphi 0, %s125
      %s142 = sphi 0, %s126
      %s148 = sphi 0, %s150
      %s151 = sphi 0, %s148
      %s152 = sphi 0, %s151
      %s168 = sphi 0, %s152
    $region4: #{bottleneck_forward.5} parent=1 // loop_header_branch
      %26 = sbr.rel (%p24) target = $region8
    $region5: #{bottleneck_forward.5} parent=1 // loop_body
      %s28 = ssub.s32 %s23, 1
      %s29 = ssub.s32 %s23, 2
      %s30 = sadd.s32 %s23, 1
      %s32 = sadd.s32 %s31, 1
      %p35 = scmp.eq.s32.totalorder %s23, 1
      %p36 = scmp.ne.s32.totalorder %s31, %s33
      %p37 = scmp.eq.s32.totalorder %s23, 0
      %p38 = por %p36, %p37
      %p39 = scmp.ne.s32.totalorder %s31, %s33
      %p40 = scmp.eq.s32.totalorder %s28, 1
      %p41 = por %p39, %p40
      %p42 = scmp.ne.s32.totalorder %s33, %s34
      %p43 = scmp.eq.s32.totalorder %s28, 0
      %p44 = por %p42, %p43
      %p45 = scmp.ne.s32.totalorder %s33, %s34
      %p46 = scmp.eq.s32.totalorder %s29, 1
      %p47 = por %p45, %p46
      %p49 = scmp.ne.s32.totalorder %s34, %s48
      %p50 = scmp.eq.s32.totalorder %s29, 0
      %p51 = por %p49, %p50
      %s52 = ssub.s32 %s23, %s30
      %p53 = scmp.eq.s32.totalorder %s52, 0
      %s55 = sadd.s32 %s54, 1
      %s56 = scalar_select %p53, %s54, %s55
      %p59 = pneg %p53
      %p60 = scmp.eq.s32.totalorder %s23, 1
      %p61 = por %p59, %p60
      %p62 = scmp.ne.s32.totalorder %s54, %s57
      %p63 = scmp.eq.s32.totalorder %s23, 0
      %p64 = por %p62, %p63
      %p65 = scmp.ne.s32.totalorder %s54, %s57
      %p66 = scmp.eq.s32.totalorder %s28, 1
      %p67 = por %p65, %p66
      %p68 = scmp.ne.s32.totalorder %s57, %s58
      %p69 = scmp.eq.s32.totalorder %s28, 0
      %p70 = por %p68, %p69
      %p71 = scmp.ne.s32.totalorder %s57, %s58
      %p72 = scmp.eq.s32.totalorder %s29, 1
      %p73 = por %p71, %p72
      %p75 = scmp.ne.s32.totalorder %s58, %s74
      %p76 = scmp.eq.s32.totalorder %s29, 0
      %p77 = por %p75, %p76
      %s79 = sadd.s32 %s78, 1
      %p82 = scmp.eq.s32.totalorder %s23, 1
      %p83 = scmp.ne.s32.totalorder %s78, %s80
      %p84 = scmp.eq.s32.totalorder %s23, 0
      %p85 = por %p83, %p84
      %p86 = scmp.ne.s32.totalorder %s78, %s80
      %p87 = scmp.eq.s32.totalorder %s28, 1
      %p88 = por %p86, %p87
      %p89 = scmp.ne.s32.totalorder %s80, %s81
      %p90 = scmp.eq.s32.totalorder %s28, 0
      %p91 = por %p89, %p90
      %p92 = scmp.ne.s32.totalorder %s80, %s81
      %p93 = scmp.eq.s32.totalorder %s29, 1
      %p94 = por %p92, %p93
      %p96 = scmp.ne.s32.totalorder %s81, %s95
      %p97 = scmp.eq.s32.totalorder %s29, 0
      %p98 = por %p96, %p97
      %s100 = sadd.s32 %s99, 1
      %p103 = scmp.eq.s32.totalorder %s23, 1
      %p104 = scmp.ne.s32.totalorder %s99, %s101
      %p105 = scmp.eq.s32.totalorder %s23, 0
      %p106 = por %p104, %p105
      %p107 = scmp.ne.s32.totalorder %s99, %s101
      %p108 = scmp.eq.s32.totalorder %s28, 1
      %p109 = por %p107, %p108
      %p110 = scmp.ne.s32.totalorder %s101, %s102
      %p111 = scmp.eq.s32.totalorder %s28, 0
      %p112 = por %p110, %p111
      %p113 = scmp.ne.s32.totalorder %s101, %s102
      %p114 = scmp.eq.s32.totalorder %s29, 1
      %p115 = por %p113, %p114
      %p117 = scmp.ne.s32.totalorder %s102, %s116
      %p118 = scmp.eq.s32.totalorder %s29, 0
      %p119 = por %p117, %p118
      %s120 = ssub.s32 %s23, %s30
      %p121 = scmp.eq.s32.totalorder %s120, 0
      %s123 = sadd.s32 %s122, 1
      %s124 = scalar_select %p121, %s122, %s123
      %p127 = pneg %p121
      %p128 = scmp.eq.s32.totalorder %s23, 1
      %p129 = por %p127, %p128
      %p130 = scmp.ne.s32.totalorder %s122, %s125
      %p131 = scmp.eq.s32.totalorder %s23, 0
      %p132 = por %p130, %p131
      %p133 = scmp.ne.s32.totalorder %s122, %s125
      %p134 = scmp.eq.s32.totalorder %s28, 1
      %p135 = por %p133, %p134
      %p136 = scmp.ne.s32.totalorder %s125, %s126
      %p137 = scmp.eq.s32.totalorder %s28, 0
      %p138 = por %p136, %p137
      %p139 = scmp.ne.s32.totalorder %s125, %s126
      %p140 = scmp.eq.s32.totalorder %s29, 1
      %p141 = por %p139, %p140
      %p143 = scmp.ne.s32.totalorder %s126, %s142
      %p144 = scmp.eq.s32.totalorder %s29, 0
      %p145 = por %p143, %p144
      %s146 = ssub.s32 %s23, %s30
      %p147 = scmp.eq.s32.totalorder %s146, 0
      %s149 = sadd.s32 %s148, 1
      %s150 = scalar_select %p147, %s148, %s149
      %p153 = pneg %p147
      %p154 = scmp.eq.s32.totalorder %s23, 1
      %p155 = por %p153, %p154
      %p156 = scmp.ne.s32.totalorder %s148, %s151
      %p157 = scmp.eq.s32.totalorder %s23, 0
      %p158 = por %p156, %p157
      %p159 = scmp.ne.s32.totalorder %s148, %s151
      %p160 = scmp.eq.s32.totalorder %s28, 1
      %p161 = por %p159, %p160
      %p162 = scmp.ne.s32.totalorder %s151, %s152
      %p163 = scmp.eq.s32.totalorder %s28, 0
      %p164 = por %p162, %p163
      %p165 = scmp.ne.s32.totalorder %s151, %s152
      %p166 = scmp.eq.s32.totalorder %s29, 1
      %p167 = por %p165, %p166
      %p169 = scmp.ne.s32.totalorder %s152, %s168
      %p170 = scmp.eq.s32.totalorder %s29, 0
      %p171 = por %p169, %p170
      %p172 = scmp.le.s32.totalorder 1, %s23
      %p173 = scmp.lt.s32.totalorder %s23, 3
      %p174 = pnand %p172, %p173
      %p175 = pneg %p174
      // Predicated region
      $region9: #{bottleneck_forward.5} parent=5 // pred_check
        _
      $region10: #{bottleneck_forward.5} parent=5 // pred_check_branch
        %177 = sbr.rel (%p174) target = $region12
      $region11: #{bottleneck_forward.5} parent=5 // pred_region
        %s178 = ssub.s32 %s23, 1
        // Predicated region
        $region13: #{bottleneck_forward.5} parent=11 // pred_check
          %p179 = pneg %p44
        $region14: #{bottleneck_forward.5} parent=11 // pred_check_branch
          %181 = sbr.rel (%p179) target = $region16
        $region15: #{bottleneck_forward.5} parent=11 // pred_region
          %s183 = ssub.s32 128, 128
          %184 = vsyncadd [#allocation3], %s183
          %s186 = sshll.u32 [#allocation2], 4
          %s187 = int_to_ptr.vmem [resolvable:$true] %s186
          %189 = dma.hbm_to_vmem [thread:$0]  %s0, 128, %s187, [#allocation3]
        $region16: #{bottleneck_forward.5} parent=11 // pred_fallthru
          _
        // Predicated region
        $region17: #{bottleneck_forward.5} parent=11 // pred_check
          %p190 = pneg %p91
        $region18: #{bottleneck_forward.5} parent=11 // pred_check_branch
          %192 = sbr.rel (%p190) target = $region20
        $region19: #{bottleneck_forward.5} parent=11 // pred_region
          %s194 = ssub.s32 128, 128
          %195 = vsyncadd [#allocation6], %s194
          %s197 = sshll.u32 [#allocation7], 4
          %s198 = int_to_ptr.vmem [resolvable:$true] %s197
          %200 = dma.hbm_to_vmem [thread:$0]  %s2, 128, %s198, [#allocation6]
        $region20: #{bottleneck_forward.5} parent=11 // pred_fallthru
          _
        // Predicated region
        $region21: #{bottleneck_forward.5} parent=11 // pred_check
          %p201 = pneg %p112
        $region22: #{bottleneck_forward.5} parent=11 // pred_check_branch
          %203 = sbr.rel (%p201) target = $region24
        $region23: #{bottleneck_forward.5} parent=11 // pred_region
          %s205 = ssub.s32 1024, 1024
          %206 = vsyncadd [#allocation9], %s205
          %s207 = sshll.u32 [#allocation8], 4
          %s208 = int_to_ptr.vmem [resolvable:$true] %s207
          %213 = dma.hbm_to_vmem [thread:$0]  %s3, 1024, %s208, [#allocation9], 512, 512, 32
        $region24: #{bottleneck_forward.5} parent=11 // pred_fallthru
          _
      $region12: #{bottleneck_forward.5} parent=5 // pred_fallthru
        _
      %p214 = scmp.lt.s32.totalorder %s23, 2
      // Predicated region
      $region25: #{bottleneck_forward.5} parent=5 // pred_check
        %p215 = pneg %p214
      $region26: #{bottleneck_forward.5} parent=5 // pred_check_branch
        %217 = sbr.rel (%p215) target = $region28
      $region27: #{bottleneck_forward.5} parent=5 // pred_region
        // Predicated region
        $region29: #{bottleneck_forward.5} parent=27 // pred_check
          %p218 = pneg %p64
        $region30: #{bottleneck_forward.5} parent=27 // pred_check_branch
          %220 = sbr.rel (%p218) target = $region32
        $region31: #{bottleneck_forward.5} parent=27 // pred_region
          %s221 = sand.u32 %s23, 1
          %s222 = scalar_lea.sflag [#allocation6], %s221
          %s223 = sand.u32 %s54, 1
          %s224 = smul.addr %s223, 32
          %s225 = scalar_lea.vmem [#allocation5], %s224
          %s226 = smul.u32 4, %s23
          %s228 = ssub.s32 512, 512
          %229 = vsyncadd %s222, %s228
          %s230 = smul.addr %s226, 128
          %s231 = scalar_lea.hbm %s1, %s230
          %s233 = sshll.u32 %s225, 4
          %s234 = int_to_ptr.vmem [resolvable:$true] %s233
          %236 = dma.hbm_to_vmem [thread:$0]  %s231, 512, %s234, %s222
        $region32: #{bottleneck_forward.5} parent=27 // pred_fallthru
          _
      $region28: #{bottleneck_forward.5} parent=5 // pred_fallthru
        _
      %p237 = scmp.le.s32.totalorder 1, %s23
      %p238 = scmp.lt.s32.totalorder %s23, 3
      %p239 = pnand %p237, %p238
      %p240 = pneg %p239
      // Predicated region
      $region33: #{bottleneck_forward.5} parent=5 // pred_check
        _
      $region34: #{bottleneck_forward.5} parent=5 // pred_check_branch
        %242 = sbr.rel (%p239) target = $region36
      $region35: #{bottleneck_forward.5} parent=5 // pred_region
        %s243 = ssub.s32 %s23, 1
        // Predicated region
        $region37: #{bottleneck_forward.5} parent=35 // pred_check
          %p244 = pneg %p44
        $region38: #{bottleneck_forward.5} parent=35 // pred_check_branch
          %246 = sbr.rel (%p244) target = $region40
        $region39: #{bottleneck_forward.5} parent=35 // pred_region
          %247 = dma.done [#allocation3], 128
        $region40: #{bottleneck_forward.5} parent=35 // pred_fallthru
          _
        %s248 = sand.u32 %s28, 1
        %s249 = scalar_lea.sflag [#allocation6], %s248
        %s250 = sand.u32 %s57, 1
        %s251 = smul.addr %s250, 32
        %s252 = scalar_lea.vmem [#allocation5], %s251
        // Predicated region
        $region41: #{bottleneck_forward.5} parent=35 // pred_check
          %p253 = pneg %p70
        $region42: #{bottleneck_forward.5} parent=35 // pred_check_branch
          %255 = sbr.rel (%p253) target = $region44
        $region43: #{bottleneck_forward.5} parent=35 // pred_region
          %256 = dma.done %s249, 512
        $region44: #{bottleneck_forward.5} parent=35 // pred_fallthru
          _
        // Predicated region
        $region45: #{bottleneck_forward.5} parent=35 // pred_check
          %p257 = pneg %p91
        $region46: #{bottleneck_forward.5} parent=35 // pred_check_branch
          %259 = sbr.rel (%p257) target = $region48
        $region47: #{bottleneck_forward.5} parent=35 // pred_region
          %260 = dma.done [#allocation6], 128
        $region48: #{bottleneck_forward.5} parent=35 // pred_fallthru
          _
        // Predicated region
        $region49: #{bottleneck_forward.5} parent=35 // pred_check
          %p261 = pneg %p112
        $region50: #{bottleneck_forward.5} parent=35 // pred_check_branch
          %263 = sbr.rel (%p261) target = $region52
        $region51: #{bottleneck_forward.5} parent=35 // pred_region
          %264 = dma.done [#allocation9], 1024
        $region52: #{bottleneck_forward.5} parent=35 // pred_fallthru
          _
        %p265 = pneg %p44
        %p266 = pneg %p41
        %s267 = sand.u32 %s28, 1
        %s268 = scalar_lea.sflag [#allocation6], %s267
        %s269 = sand.u32 %s57, 1
        %s270 = smul.addr %s269, 32
        %s271 = scalar_lea.vmem [#allocation5], %s270
        %p272 = pneg %p70
        %p273 = pneg %p67
        %p274 = pneg %p91
        %p275 = pneg %p88
        %p276 = pneg %p112
        %p277 = pneg %p109
        %p278 = pneg %p138
        %p279 = pneg %p135
        %s280 = sand.u32 %s125, 1
        %s281 = scalar_lea.sflag [#allocation4], %s280
        %s282 = sand.u32 %s125, 1
        %s283 = smul.addr %s282, 32
        %s284 = scalar_lea.vmem [#allocation10], %s283
        %p285 = pneg %p164
        %p286 = pneg %p161
        %s287 = sand.u32 %s151, 1
        %s288 = scalar_lea.sflag [#allocation12], %s287
        %s289 = sand.u32 %s151, 1
        %s290 = smul.addr %s289, 8
        %s291 = scalar_lea.vmem [#allocation11], %s290
        %s292 = smul.u32 4, %s28
        %s293 = smul.u32 4, %s28
        %v294 = vld [vmem:[#allocation2] sm:$0xff]
        %v295 = vmul.f32 %v294, 0.0009765625
        %v296 = vmul.f32 %v295, %v295
        %298 = vrot.lane.b32.xlu0 %v296, 1
        %v299 = vpop.permute.xlu0 %298
        %v301 = vsub.f32 %v295, %v299
        %v302 = vmax.f32 %v301, 0.0
        %v303 = vadd.f32 %v302, 1e-05
        %v304 = vrsqrt.pop %v303
        %306 = vrot.lane.b32.xlu0 %v304, 125
        %v307 = vpop.permute.xlu0 %306
        %v309 = vmul.f32 %v294, %v307
        %311 = vrot.lane.b32.xlu0 %v309, 2
        %v312 = vpop.permute.xlu0 %311
        %v314 = vmul.f32 %v295, %v312
        %316 = vrot.lane.b32.xlu0 %v314, 127
        %v317 = vpop.permute.xlu0 %316
        %v319 = vsub.f32 %v294, %v317
        %v320 = vld [vmem:[%s252] sm:$0xff]
        %v321 = vld [vmem:[%s252 + $0x8] sm:$0xff]
        %v322 = vld [vmem:[%s252 + $0x10] sm:$0xff]
        %v323 = vld [vmem:[%s252 + $0x18] sm:$0xff]
        %324 = vset.pattern.permute.xlu0 0
        %325 = vperm.xlu0 %324, %v309
        %v326 = vpop.permute.xlu0 %325
        %v328 = vmul.f32 %v320, %v326
        %v329 = vmul.f32 %v321, %v326
        %v330 = vmul.f32 %v322, %v326
        %v331 = vmul.f32 %v323, %v326
        %333 = vset.pattern.permute.xlu0 1
        %334 = vperm.xlu0 %333, %v319
        %v335 = vpop.permute.xlu0 %334
        %v337 = vadd.f32 %v328, %v335
        %v338 = vadd.f32 %v329, %v335
        %v339 = vadd.f32 %v330, %v335
        %v340 = vadd.f32 %v331, %v335
        %v341 = vmax.f32 %v337, 0.0
        %v342 = vmax.f32 %v338, 0.0
        %v343 = vmax.f32 %v339, 0.0
        %v344 = vmax.f32 %v340, 0.0
        %v345 = vld [vmem:[#allocation8] sm:$0xff]
        %v346 = vld [vmem:[#allocation8 + $0x8] sm:$0xff]
        %v347 = vld [vmem:[#allocation8 + $0x10] sm:$0xff]
        %v348 = vld [vmem:[#allocation8 + $0x18] sm:$0xff]
        %v349 = vld [vmem:[#allocation8 + $0x20] sm:$0x1]
        %v350 = vld [vmem:[#allocation8 + $0x28] sm:$0x1]
        %v351 = vld [vmem:[#allocation8 + $0x30] sm:$0x1]
        %v352 = vld [vmem:[#allocation8 + $0x38] sm:$0x1]
        %353 = vrot.lane.b32.xlu0 %v341, 17
        %v354 = vpop.permute.xlu0 %353
        %355 = vrot.lane.b32.xlu0 %v342, 17
        %v356 = vpop.permute.xlu0 %355
        %357 = vrot.lane.b32.xlu0 %v343, 17
        %v358 = vpop.permute.xlu0 %357
        %359 = vrot.lane.b32.xlu0 %v344, 17
        %v360 = vpop.permute.xlu0 %359
        %v361 = vlaneseq
        %v362 = vand.u32 %v361, 127
        %vm363 = vcmp.lt.s32.totalorder %v362, 17
        %v364 = vsel %vm363, %v358, %v360
        %v365 = vsel %vm363, %v356, %v358
        %v366 = vsel %vm363, %v354, %v356
        %v367 = vsel %vm363, %v360, %v354
        %v368 = vlaneseq
        %v369 = vshrl.u32 %v368, 7
        %v370 = vsub.s32 0, %v369
        %v371 = vrot.slane %v345, %v370
        %v372 = vlaneseq
        %v373 = vshrl.u32 %v372, 7
        %v374 = vsub.s32 0, %v373
        %v375 = vrot.slane %v346, %v374
        %v376 = vlaneseq
        %v377 = vshrl.u32 %v376, 7
        %v378 = vsub.s32 0, %v377
        %v379 = vrot.slane %v347, %v378
        %v380 = vlaneseq
        %v381 = vshrl.u32 %v380, 7
        %v382 = vsub.s32 0, %v381
        %v383 = vrot.slane %v348, %v382
        %v384 = vmul.f32 %v367, %v371
        %v385 = vmul.f32 %v366, %v375
        %v386 = vmul.f32 %v365, %v379
        %v387 = vmul.f32 %v364, %v383
        %388 = vrot.lane.b32.xlu0 %v341, 16
        %v389 = vpop.permute.xlu0 %388
        %390 = vrot.lane.b32.xlu0 %v342, 16
        %v391 = vpop.permute.xlu0 %390
        %392 = vrot.lane.b32.xlu0 %v343, 16
        %v393 = vpop.permute.xlu0 %392
        %394 = vrot.lane.b32.xlu0 %v344, 16
        %v395 = vpop.permute.xlu0 %394
        %vm396 = vcmp.lt.s32.totalorder %v362, 16
        %v397 = vsel %vm396, %v393, %v395
        %v398 = vsel %vm396, %v391, %v393
        %v399 = vsel %vm396, %v389, %v391
        %v400 = vsel %vm396, %v395, %v389
        %v401 = vlaneseq
        %v402 = vshrl.u32 %v401, 7
        %v403 = vsub.s32 1, %v402
        %v404 = vrot.slane %v345, %v403
        %v405 = vlaneseq
        %v406 = vshrl.u32 %v405, 7
        %v407 = vsub.s32 1, %v406
        %v408 = vrot.slane %v346, %v407
        %v409 = vlaneseq
        %v410 = vshrl.u32 %v409, 7
        %v411 = vsub.s32 1, %v410
        %v412 = vrot.slane %v347, %v411
        %v413 = vlaneseq
        %v414 = vshrl.u32 %v413, 7
        %v415 = vsub.s32 1, %v414
        %v416 = vrot.slane %v348, %v415
        %v417 = vmul.f32 %v400, %v404
        %v418 = vmul.f32 %v399, %v408
        %v419 = vmul.f32 %v398, %v412
        %v420 = vmul.f32 %v397, %v416
        %421 = vrot.lane.b32.xlu0 %v341, 15
        %v422 = vpop.permute.xlu0 %421
        %423 = vrot.lane.b32.xlu0 %v342, 15
        %v424 = vpop.permute.xlu0 %423
        %425 = vrot.lane.b32.xlu0 %v343, 15
        %v426 = vpop.permute.xlu0 %425
        %427 = vrot.lane.b32.xlu0 %v344, 15
        %v428 = vpop.permute.xlu0 %427
        %vm429 = vcmp.lt.s32.totalorder %v362, 15
        %v430 = vsel %vm429, %v426, %v428
        %v431 = vsel %vm429, %v424, %v426
        %v432 = vsel %vm429, %v422, %v424
        %v433 = vsel %vm429, %v428, %v422
        %v434 = vlaneseq
        %v435 = vshrl.u32 %v434, 7
        %v436 = vsub.s32 2, %v435
        %v437 = vrot.slane %v345, %v436
        %v438 = vlaneseq
        %v439 = vshrl.u32 %v438, 7
        %v440 = vsub.s32 2, %v439
        %v441 = vrot.slane %v346, %v440
        %v442 = vlaneseq
        %v443 = vshrl.u32 %v442, 7
        %v444 = vsub.s32 2, %v443
        %v445 = vrot.slane %v347, %v444
        %v446 = vlaneseq
        %v447 = vshrl.u32 %v446, 7
        %v448 = vsub.s32 2, %v447
        %v449 = vrot.slane %v348, %v448
        %v450 = vmul.f32 %v433, %v437
        %v451 = vmul.f32 %v432, %v441
        %v452 = vmul.f32 %v431, %v445
        %v453 = vmul.f32 %v430, %v449
        %454 = vrot.lane.b32.xlu0 %v341, 1
        %v455 = vpop.permute.xlu0 %454
        %456 = vrot.lane.b32.xlu0 %v342, 1
        %v457 = vpop.permute.xlu0 %456
        %458 = vrot.lane.b32.xlu0 %v343, 1
        %v459 = vpop.permute.xlu0 %458
        %460 = vrot.lane.b32.xlu0 %v344, 1
        %v461 = vpop.permute.xlu0 %460
        %vm462 = vcmp.lt.s32.totalorder %v362, 1
        %v463 = vsel %vm462, %v459, %v461
        %v464 = vsel %vm462, %v457, %v459
        %v465 = vsel %vm462, %v455, %v457
        %v466 = vsel %vm462, %v461, %v455
        %v467 = vlaneseq
        %v468 = vshrl.u32 %v467, 7
        %v469 = vsub.s32 3, %v468
        %v470 = vrot.slane %v345, %v469
        %v471 = vlaneseq
        %v472 = vshrl.u32 %v471, 7
        %v473 = vsub.s32 3, %v472
        %v474 = vrot.slane %v346, %v473
        %v475 = vlaneseq
        %v476 = vshrl.u32 %v475, 7
        %v477 = vsub.s32 3, %v476
        %v478 = vrot.slane %v347, %v477
        %v479 = vlaneseq
        %v480 = vshrl.u32 %v479, 7
        %v481 = vsub.s32 3, %v480
        %v482 = vrot.slane %v348, %v481
        %v483 = vmul.f32 %v466, %v470
        %v484 = vmul.f32 %v465, %v474
        %v485 = vmul.f32 %v464, %v478
        %v486 = vmul.f32 %v463, %v482
        %v487 = vlaneseq
        %v488 = vshrl.u32 %v487, 7
        %v489 = vsub.s32 4, %v488
        %v490 = vrot.slane %v345, %v489
        %v491 = vlaneseq
        %v492 = vshrl.u32 %v491, 7
        %v493 = vsub.s32 4, %v492
        %v494 = vrot.slane %v346, %v493
        %v495 = vlaneseq
        %v496 = vshrl.u32 %v495, 7
        %v497 = vsub.s32 4, %v496
        %v498 = vrot.slane %v347, %v497
        %v499 = vlaneseq
        %v500 = vshrl.u32 %v499, 7
        %v501 = vsub.s32 4, %v500
        %v502 = vrot.slane %v348, %v501
        %v503 = vmul.f32 %v341, %v490
        %v504 = vmul.f32 %v342, %v494
        %v505 = vmul.f32 %v343, %v498
        %v506 = vmul.f32 %v344, %v502
        %507 = vrot.lane.b32.xlu0 %v341, 127
        %v508 = vpop.permute.xlu0 %507
        %509 = vrot.lane.b32.xlu0 %v342, 127
        %v510 = vpop.permute.xlu0 %509
        %511 = vrot.lane.b32.xlu0 %v343, 127
        %v512 = vpop.permute.xlu0 %511
        %513 = vrot.lane.b32.xlu0 %v344, 127
        %v514 = vpop.permute.xlu0 %513
        %vm515 = vcmp.lt.s32.totalorder %v362, 127
        %v516 = vsel %vm515, %v512, %v514
        %v517 = vsel %vm515, %v510, %v512
        %v518 = vsel %vm515, %v508, %v510
        %v519 = vsel %vm515, %v514, %v508
        %v520 = vlaneseq
        %v521 = vshrl.u32 %v520, 7
        %v522 = vsub.s32 5, %v521
        %v523 = vrot.slane %v345, %v522
        %v524 = vlaneseq
        %v525 = vshrl.u32 %v524, 7
        %v526 = vsub.s32 5, %v525
        %v527 = vrot.slane %v346, %v526
        %v528 = vlaneseq
        %v529 = vshrl.u32 %v528, 7
        %v530 = vsub.s32 5, %v529
        %v531 = vrot.slane %v347, %v530
        %v532 = vlaneseq
        %v533 = vshrl.u32 %v532, 7
        %v534 = vsub.s32 5, %v533
        %v535 = vrot.slane %v348, %v534
        %v536 = vmul.f32 %v518, %v523
        %v537 = vmul.f32 %v517, %v527
        %v538 = vmul.f32 %v516, %v531
        %v539 = vmul.f32 %v519, %v535
        %540 = vrot.lane.b32.xlu0 %v341, 113
        %v541 = vpop.permute.xlu0 %540
        %542 = vrot.lane.b32.xlu0 %v342, 113
        %v543 = vpop.permute.xlu0 %542
        %544 = vrot.lane.b32.xlu0 %v343, 113
        %v545 = vpop.permute.xlu0 %544
        %546 = vrot.lane.b32.xlu0 %v344, 113
        %v547 = vpop.permute.xlu0 %546
        %vm548 = vcmp.lt.s32.totalorder %v362, 113
        %v549 = vsel %vm548, %v545, %v547
        %v550 = vsel %vm548, %v543, %v545
        %v551 = vsel %vm548, %v541, %v543
        %v552 = vsel %vm548, %v547, %v541
        %v553 = vlaneseq
        %v554 = vshrl.u32 %v553, 7
        %v555 = vsub.s32 6, %v554
        %v556 = vrot.slane %v345, %v555
        %v557 = vlaneseq
        %v558 = vshrl.u32 %v557, 7
        %v559 = vsub.s32 6, %v558
        %v560 = vrot.slane %v346, %v559
        %v561 = vlaneseq
        %v562 = vshrl.u32 %v561, 7
        %v563 = vsub.s32 6, %v562
        %v564 = vrot.slane %v347, %v563
        %v565 = vlaneseq
        %v566 = vshrl.u32 %v565, 7
        %v567 = vsub.s32 6, %v566
        %v568 = vrot.slane %v348, %v567
        %v569 = vmul.f32 %v551, %v556
        %v570 = vmul.f32 %v550, %v560
        %v571 = vmul.f32 %v549, %v564
        %v572 = vmul.f32 %v552, %v568
        %573 = vrot.lane.b32.xlu0 %v341, 112
        %v574 = vpop.permute.xlu0 %573
        %575 = vrot.lane.b32.xlu0 %v342, 112
        %v576 = vpop.permute.xlu0 %575
        %577 = vrot.lane.b32.xlu0 %v343, 112
        %v578 = vpop.permute.xlu0 %577
        %579 = vrot.lane.b32.xlu0 %v344, 112
        %v580 = vpop.permute.xlu0 %579
        %vm581 = vcmp.lt.s32.totalorder %v362, 112
        %v582 = vsel %vm581, %v578, %v580
        %v583 = vsel %vm581, %v576, %v578
        %v584 = vsel %vm581, %v574, %v576
        %v585 = vsel %vm581, %v580, %v574
        %v586 = vlaneseq
        %v587 = vshrl.u32 %v586, 7
        %v588 = vsub.s32 7, %v587
        %v589 = vrot.slane %v345, %v588
        %v590 = vlaneseq
        %v591 = vshrl.u32 %v590, 7
        %v592 = vsub.s32 7, %v591
        %v593 = vrot.slane %v346, %v592
        %v594 = vlaneseq
        %v595 = vshrl.u32 %v594, 7
        %v596 = vsub.s32 7, %v595
        %v597 = vrot.slane %v347, %v596
        %v598 = vlaneseq
        %v599 = vshrl.u32 %v598, 7
        %v600 = vsub.s32 7, %v599
        %v601 = vrot.slane %v348, %v600
        %v602 = vmul.f32 %v584, %v589
        %v603 = vmul.f32 %v583, %v593
        %v604 = vmul.f32 %v582, %v597
        %v605 = vmul.f32 %v585, %v601
        %606 = vrot.lane.b32.xlu0 %v341, 111
        %v607 = vpop.permute.xlu0 %606
        %608 = vrot.lane.b32.xlu0 %v342, 111
        %v609 = vpop.permute.xlu0 %608
        %610 = vrot.lane.b32.xlu0 %v343, 111
        %v611 = vpop.permute.xlu0 %610
        %612 = vrot.lane.b32.xlu0 %v344, 111
        %v613 = vpop.permute.xlu0 %612
        %vm614 = vcmp.lt.s32.totalorder %v362, 111
        %v615 = vsel %vm614, %v611, %v613
        %v616 = vsel %vm614, %v609, %v611
        %v617 = vsel %vm614, %v607, %v609
        %v618 = vsel %vm614, %v613, %v607
        %v619 = vlaneseq
        %v620 = vshrl.u32 %v619, 7
        %v621 = vsub.s32 0, %v620
        %v622 = vrot.slane %v349, %v621
        %v623 = vlaneseq
        %v624 = vshrl.u32 %v623, 7
        %v625 = vsub.s32 0, %v624
        %v626 = vrot.slane %v350, %v625
        %v627 = vlaneseq
        %v628 = vshrl.u32 %v627, 7
        %v629 = vsub.s32 0, %v628
        %v630 = vrot.slane %v351, %v629
        %v631 = vlaneseq
        %v632 = vshrl.u32 %v631, 7
        %v633 = vsub.s32 0, %v632
        %v634 = vrot.slane %v352, %v633
        %v635 = vmul.f32 %v617, %v622
        %v636 = vmul.f32 %v616, %v626
        %v637 = vmul.f32 %v615, %v630
        %v638 = vmul.f32 %v618, %v634
        %v639 = vld [vmem:[#allocation7] sm:$0xff]
        %vm640 = vcmask 588800
        %v642 = vsel %vm640, %v639, 0
        %644 = vmatprep.subr.mxu0 %v385
        %645 = vmatpush1.msra.mxu0 %v384
        %646 = vmatprep.subr.mxu0 %v418
        %647 = vmatpush1.msra.mxu0 %v417
        %648 = vmatprep.subr.mxu0 %v451
        %649 = vmatpush1.msra.mxu0 %v450
        %650 = vmatprep.subr.mxu0 %v484
        %651 = vmatpush1.msra.mxu0 %v483
        %652 = vmatprep.subr.mxu0 %v504
        %653 = vmatpush1.msra.mxu0 %v503
        %654 = vmatprep.subr.mxu0 %v537
        %655 = vmatpush1.msra.mxu0 %v536
        %656 = vmatprep.subr.mxu0 %v570
        %657 = vmatpush1.msra.mxu0 %v569
        %658 = vmatprep.subr.mxu0 %v603
        %659 = vmatpush1.msra.mxu0 %v602
        %660 = vmatprep.subr.mxu0 %v636
        %661 = vmatpush1.msra.mxu0 %v635
        %662 = vmatprep.subr.mxu0 0.0
        %663 = vmatpush1.msra.mxu0 0.0
        %664 = vmatprep.subr.mxu0 0.0
        %665 = vmatpush1.msra.mxu0 0.0
        %666 = vmatprep.subr.mxu0 0.0
        %667 = vmatpush1.msra.mxu0 0.0
        %668 = vmatprep.subr.mxu0 0.0
        %669 = vmatpush1.msra.mxu0 0.0
        %670 = vmatprep.subr.mxu0 0.0
        %671 = vmatpush1.msra.mxu0 0.0
        %672 = vmatprep.subr.mxu0 0.0
        %673 = vmatpush1.msra.mxu0 0.0
        %674 = vmatprep.subr.mxu0 0.0
        %675 = vmatpush1.msra.mxu0 0.0
        %676 = vmatprep.subr.mxu0 0.0
        %677 = vmatpush1.msra.mxu0 0.0
        %678 = vmatprep.subr.mxu0 0.0
        %679 = vmatpush1.msra.mxu0 0.0
        %680 = vmatprep.subr.mxu0 0.0
        %681 = vmatpush1.msra.mxu0 0.0
        %682 = vmatprep.subr.mxu0 0.0
        %683 = vmatpush1.msra.mxu0 0.0
        %684 = vmatprep.subr.mxu0 0.0
        %685 = vmatpush1.msra.mxu0 0.0
        %686 = vmatprep.subr.mxu0 0.0
        %687 = vmatpush1.msra.mxu0 0.0
        %688 = vmatprep.subr.mxu0 0.0
        %689 = vmatpush1.msra.mxu0 0.0
        %690 = vmatprep.subr.mxu0 0.0
        %691 = vmatpush1.msra.mxu0 0.0
        %692 = vmatprep.subr.mxu0 0.0
        %693 = vmatpush1.msra.mxu0 0.0
        %694 = vmatprep.subr.mxu0 0.0
        %695 = vmatpush1.msra.mxu0 0.0
        %696 = vmatprep.subr.mxu0 0.0
        %697 = vmatpush1.msra.mxu0 0.0
        %698 = vmatprep.subr.mxu0 0.0
        %699 = vmatpush1.msra.mxu0 0.0
        %700 = vmatprep.subr.mxu0 0.0
        %701 = vmatpush1.msra.mxu0 0.0
        %702 = vmatprep.subr.mxu0 0.0
        %703 = vmatpush1.msra.mxu0 0.0
        %704 = vmatprep.subr.mxu0 0.0
        %705 = vmatpush1.msra.mxu0 0.0
        %706 = vmatprep.subr.mxu0 0.0
        %707 = vmatpush1.msra.mxu0 0.0
        %708 = vmatprep.mubr.f32.mxu0 0.0
        %709 = vmatmul.mubr.f32.gmra.mrb[0].mxu0 %v642
        %v710 = vpop.f32.mrb[0].mxu0
        %v711 = vadd.f32 0.0, %v710
        %v712 = vpop.f32.mrb[0].mxu0
        %v713 = vadd.f32 0.0, %v712
        %714 = vdwg.mxu0
        %715 = vmatprep.subr.mxu0 %v387
        %716 = vmatpush1.msra.mxu0 %v386
        %717 = vmatprep.subr.mxu0 %v420
        %718 = vmatpush1.msra.mxu0 %v419
        %719 = vmatprep.subr.mxu0 %v453
        %720 = vmatpush1.msra.mxu0 %v452
        %721 = vmatprep.subr.mxu0 %v486
        %722 = vmatpush1.msra.mxu0 %v485
        %723 = vmatprep.subr.mxu0 %v506
        %724 = vmatpush1.msra.mxu0 %v505
        %725 = vmatprep.subr.mxu0 %v539
        %726 = vmatpush1.msra.mxu0 %v538
        %727 = vmatprep.subr.mxu0 %v572
        %728 = vmatpush1.msra.mxu0 %v571
        %729 = vmatprep.subr.mxu0 %v605
        %730 = vmatpush1.msra.mxu0 %v604
        %731 = vmatprep.subr.mxu0 %v638
        %732 = vmatpush1.msra.mxu0 %v637
        %733 = vmatprep.subr.mxu0 0.0
        %734 = vmatpush1.msra.mxu0 0.0
        %735 = vmatprep.subr.mxu0 0.0
        %736 = vmatpush1.msra.mxu0 0.0
        %737 = vmatprep.subr.mxu0 0.0
        %738 = vmatpush1.msra.mxu0 0.0
        %739 = vmatprep.subr.mxu0 0.0
        %740 = vmatpush1.msra.mxu0 0.0
        %741 = vmatprep.subr.mxu0 0.0
        %742 = vmatpush1.msra.mxu0 0.0
        %743 = vmatprep.subr.mxu0 0.0
        %744 = vmatpush1.msra.mxu0 0.0
        %745 = vmatprep.subr.mxu0 0.0
        %746 = vmatpush1.msra.mxu0 0.0
        %747 = vmatprep.subr.mxu0 0.0
        %748 = vmatpush1.msra.mxu0 0.0
        %749 = vmatprep.subr.mxu0 0.0
        %750 = vmatpush1.msra.mxu0 0.0
        %751 = vmatprep.subr.mxu0 0.0
        %752 = vmatpush1.msra.mxu0 0.0
        %753 = vmatprep.subr.mxu0 0.0
        %754 = vmatpush1.msra.mxu0 0.0
        %755 = vmatprep.subr.mxu0 0.0
        %756 = vmatpush1.msra.mxu0 0.0
        %757 = vmatprep.subr.mxu0 0.0
        %758 = vmatpush1.msra.mxu0 0.0
        %759 = vmatprep.subr.mxu0 0.0
        %760 = vmatpush1.msra.mxu0 0.0
        %761 = vmatprep.subr.mxu0 0.0
        %762 = vmatpush1.msra.mxu0 0.0
        %763 = vmatprep.subr.mxu0 0.0
        %764 = vmatpush1.msra.mxu0 0.0
        %765 = vmatprep.subr.mxu0 0.0
        %766 = vmatpush1.msra.mxu0 0.0
        %767 = vmatprep.subr.mxu0 0.0
        %768 = vmatpush1.msra.mxu0 0.0
        %769 = vmatprep.subr.mxu0 0.0
        %770 = vmatpush1.msra.mxu0 0.0
        %771 = vmatprep.subr.mxu0 0.0
        %772 = vmatpush1.msra.mxu0 0.0
        %773 = vmatprep.subr.mxu0 0.0
        %774 = vmatpush1.msra.mxu0 0.0
        %775 = vmatprep.subr.mxu0 0.0
        %776 = vmatpush1.msra.mxu0 0.0
        %777 = vmatprep.subr.mxu0 0.0
        %778 = vmatpush1.msra.mxu0 0.0
        %779 = vmatprep.mubr.f32.mxu0 0.0
        %780 = vmatmul.mubr.f32.gmra.mrb[0].mxu0 %v642
        %v781 = vpop.f32.mrb[0].mxu0
        %v782 = vadd.f32 0.0, %v781
        %v783 = vpop.f32.mrb[0].mxu0
        %v784 = vadd.f32 0.0, %v783
        %785 = vdwg.mxu0
        %v786 = vadd.f32 %v711, %v713
        %v787 = vadd.f32 %v786, %v782
        %v788 = vadd.f32 %v787, %v784
        %789 = vadd.xlane.f32.xlu0 %v788
        %v790 = vpop.xlane.xlu0 %789
        %v791 = vmul.f32 %v711, %v711
        %v792 = vmul.f32 %v713, %v713
        %v793 = vmul.f32 %v782, %v782
        %v794 = vmul.f32 %v784, %v784
        %v795 = vadd.f32 %v791, %v792
        %v796 = vadd.f32 %v795, %v793
        %v797 = vadd.f32 %v796, %v794
        %798 = vadd.xlane.f32.xlu0 %v797
        %v799 = vpop.xlane.xlu0 %798
        %vm800 = vcmask 7168
        %v801 = vsel %vm800, %v790, %v799
        %vm802 = vcmask 15360
        %803 = vst.msk [vmem:[%s291] sm:$0xff] %vm802, %v801
        %804 = vst [vmem:[%s284] sm:$0xff] %v711
        %805 = vst [vmem:[%s284 + $0x8] sm:$0xff] %v713
        %806 = vst [vmem:[%s284 + $0x10] sm:$0xff] %v782
        %807 = vst [vmem:[%s284 + $0x18] sm:$0xff] %v784
        %s808 = sand.u32 %s125, 1
        %s809 = scalar_lea.sflag [#allocation4], %s808
        %s810 = sand.u32 %s125, 1
        %s811 = smul.addr %s810, 32
        %s812 = scalar_lea.vmem [#allocation10], %s811
        %s813 = sand.u32 %s151, 1
        %s814 = scalar_lea.sflag [#allocation12], %s813
        %s815 = sand.u32 %s151, 1
        %s816 = smul.addr %s815, 8
        %s817 = scalar_lea.vmem [#allocation11], %s816
        // Predicated region
        $region53: #{bottleneck_forward.5} parent=35 // pred_check
          %p818 = pneg %p135
        $region54: #{bottleneck_forward.5} parent=35 // pred_check_branch
          %820 = sbr.rel (%p818) target = $region56
        $region55: #{bottleneck_forward.5} parent=35 // pred_region
          %s821 = smul.u32 4, %s28
          %s823 = ssub.s32 512, 512
          %824 = vsyncadd %s809, %s823
          %s825 = smul.addr %s821, 128
          %s826 = scalar_lea.hbm %s4, %s825
          %s828 = sshll.u32 %s812, 4
          %s829 = int_to_ptr.vmem [resolvable:$true] %s828
          %831 = dma.vmem_to_hbm [thread:$0]  %s829, 512, %s826, %s809
        $region56: #{bottleneck_forward.5} parent=35 // pred_fallthru
          _
        // Predicated region
        $region57: #{bottleneck_forward.5} parent=35 // pred_check
          %p832 = pneg %p161
        $region58: #{bottleneck_forward.5} parent=35 // pred_check_branch
          %834 = sbr.rel (%p832) target = $region60
        $region59: #{bottleneck_forward.5} parent=35 // pred_region
          %s836 = ssub.s32 128, 128
          %837 = vsyncadd %s814, %s836
          %s838 = smul.addr %s28, 128
          %s839 = scalar_lea.hbm %s5, %s838
          %s841 = sshll.u32 %s817, 4
          %s842 = int_to_ptr.vmem [resolvable:$true] %s841
          %844 = dma.vmem_to_hbm [thread:$0]  %s842, 128, %s839, %s814
        $region60: #{bottleneck_forward.5} parent=35 // pred_fallthru
          _
      $region36: #{bottleneck_forward.5} parent=5 // pred_fallthru
        _
      %p845 = scmp.le.s32.totalorder 2, %s23
      // Predicated region
      $region61: #{bottleneck_forward.5} parent=5 // pred_check
        %p846 = pneg %p845
      $region62: #{bottleneck_forward.5} parent=5 // pred_check_branch
        %848 = sbr.rel (%p846) target = $region64
      $region63: #{bottleneck_forward.5} parent=5 // pred_region
        %s849 = ssub.s32 %s23, 2
        // Predicated region
        $region65: #{bottleneck_forward.5} parent=63 // pred_check
          %p850 = pneg %p141
        $region66: #{bottleneck_forward.5} parent=63 // pred_check_branch
          %852 = sbr.rel (%p850) target = $region68
        $region67: #{bottleneck_forward.5} parent=63 // pred_region
          %s853 = sand.u32 %s126, 1
          %s854 = scalar_lea.sflag [#allocation4], %s853
          %s855 = sand.u32 %s126, 1
          %s856 = smul.addr %s855, 32
          %s857 = scalar_lea.vmem [#allocation10], %s856
          %858 = dma.done %s854, 512
        $region68: #{bottleneck_forward.5} parent=63 // pred_fallthru
          _
        // Predicated region
        $region69: #{bottleneck_forward.5} parent=63 // pred_check
          %p859 = pneg %p167
        $region70: #{bottleneck_forward.5} parent=63 // pred_check_branch
          %861 = sbr.rel (%p859) target = $region72
        $region71: #{bottleneck_forward.5} parent=63 // pred_region
          %s862 = sand.u32 %s152, 1
          %s863 = scalar_lea.sflag [#allocation12], %s862
          %s864 = sand.u32 %s152, 1
          %s865 = smul.addr %s864, 8
          %s866 = scalar_lea.vmem [#allocation11], %s865
          %867 = dma.done %s863, 128
        $region72: #{bottleneck_forward.5} parent=63 // pred_fallthru
          _
      $region64: #{bottleneck_forward.5} parent=5 // pred_fallthru
        _
    $region6: #{bottleneck_forward.5} parent=1 // loop_footer
      %s27 = sadd.s32 1, %s23
    $region7: #{bottleneck_forward.5} parent=1 // loop_footer_branch
      %22 = sbr.rel target = $region3
    $region8: #{bottleneck_forward.5} parent=1 // loop_exit
      _
    %868 = vsyncpa [#allocation3], 1
    %s869 = scalar_lea.sflag [#allocation3], 1
    %870 = vsyncpa %s869, 1
    %871 = vsyncpa [#allocation6], 1
    %s872 = scalar_lea.sflag [#allocation6], 1
    %873 = vsyncpa %s872, 1
    %874 = vsyncpa [#allocation9], 1
    %875 = vsyncpa [#allocation4], 1
    %s876 = scalar_lea.sflag [#allocation4], 1
    %877 = vsyncpa %s876, 1
    %878 = vsyncpa [#allocation12], 1
    %s879 = scalar_lea.sflag [#allocation12], 1
    %880 = vsyncpa %s879, 1

// kernel: bottleneck_forward.7
$region0: #{bottleneck_forward.7}
  #allocation0 [shape = 'u32[]', space=smem, size = 0x4, offset = 0x4, fixed_abs, tag = 'smem constant byte address 0x4 - core index']
  #allocation1 [shape = 'u32[144,128]{1,0:T(1,128)}', space=vmem, size = 0x12000, scoped, tag = 'internal scratch']
  %s0 = inlined_call_operand.hbm [shape: f32[32,4], index: 0, kind: input, shape index: {}]
  %s1 = inlined_call_operand.hbm [shape: f32[32,1024], index: 1, kind: input, shape index: {}]
  %s2 = inlined_call_operand.hbm [shape: f32[32,1024], index: 2, kind: input, shape index: {}]
  %s3 = inlined_call_operand.hbm [shape: f32[32,1024], index: 3, kind: output, shape index: {}]
  %s4 = sld [smem:[#allocation0]]
  $region57: #{bottleneck_forward.7} parent=0
    _
  %s6 = ssub.s32 1, %s4
  %s7 = scalar_select 0, %s6, %s4
  $region1: #{bottleneck_forward.7} parent=0
    #allocation2 [shape = 'u8[16384]{0}', space=vmem, size = 0x4000, scoped, tag = 'input window, operand 0, single buffered']
    #allocation3 [shape = 's32[2]{0}', space=sflag, size = 0x8, scoped, tag = 'scoped memory for bottleneck_forward.7']
    #allocation4 [shape = 's32[2]{0}', space=sflag, size = 0x8, scoped, tag = 'scoped memory for bottleneck_forward.7']
    #allocation5 [shape = 'u8[131072]{0}', space=vmem, size = 0x20000, scoped, tag = 'input window, operand 1']
    #allocation6 [shape = 's32[2]{0}', space=sflag, size = 0x8, scoped, tag = 'scoped memory for bottleneck_forward.7']
    #allocation7 [shape = 'u8[131072]{0}', space=vmem, size = 0x20000, scoped, tag = 'input window, operand 2']
    #allocation8 [shape = 'u8[131072]{0}', space=vmem, size = 0x20000, scoped, tag = 'output window, operand 0']
    %8 = vsyncpa [#allocation3], 0
    %9 = vsyncpa [#allocation6], 0
    %s10 = scalar_lea.sflag [#allocation6], 1
    %11 = vsyncpa %s10, 0
    %12 = vsyncpa [#allocation4], 0
    %s13 = scalar_lea.sflag [#allocation4], 1
    %14 = vsyncpa %s13, 0
    loop: start=0, step=1, limit=4
    $region2: #{bottleneck_forward.7} parent=1 // loop_pre_header
      _
    $region3: #{bottleneck_forward.7} parent=1 // loop_header
      %s16 = sphi 0, %s20
      %p17 = scmp.ge.s32.totalorder %s16, 4
      %s24 = sphi 0, %s24
      %s26 = sphi 0, %s24
      %s27 = sphi 0, %s26
      %s41 = sphi 0, %s27
      %s47 = sphi 0, %s49
      %s50 = sphi 0, %s47
      %s51 = sphi 0, %s50
      %s67 = sphi 0, %s51
      %s73 = sphi 0, %s75
      %s76 = sphi 0, %s73
      %s77 = sphi 0, %s76
      %s93 = sphi 0, %s77
      %s99 = sphi 0, %s101
      %s102 = sphi 0, %s99
      %s103 = sphi 0, %s102
      %s119 = sphi 0, %s103
    $region4: #{bottleneck_forward.7} parent=1 // loop_header_branch
      %19 = sbr.rel (%p17) target = $region8
    $region5: #{bottleneck_forward.7} parent=1 // loop_body
      %s21 = ssub.s32 %s16, 1
      %s22 = ssub.s32 %s16, 2
      %s23 = sadd.s32 %s16, 1
      %s25 = sadd.s32 %s24, 1
      %p28 = scmp.eq.s32.totalorder %s16, 1
      %p29 = scmp.ne.s32.totalorder %s24, %s26
      %p30 = scmp.eq.s32.totalorder %s16, 0
      %p31 = por %p29, %p30
      %p32 = scmp.ne.s32.totalorder %s24, %s26
      %p33 = scmp.eq.s32.totalorder %s21, 1
      %p34 = por %p32, %p33
      %p35 = scmp.ne.s32.totalorder %s26, %s27
      %p36 = scmp.eq.s32.totalorder %s21, 0
      %p37 = por %p35, %p36
      %p38 = scmp.ne.s32.totalorder %s26, %s27
      %p39 = scmp.eq.s32.totalorder %s22, 1
      %p40 = por %p38, %p39
      %p42 = scmp.ne.s32.totalorder %s27, %s41
      %p43 = scmp.eq.s32.totalorder %s22, 0
      %p44 = por %p42, %p43
      %s45 = ssub.s32 %s16, %s23
      %p46 = scmp.eq.s32.totalorder %s45, 0
      %s48 = sadd.s32 %s47, 1
      %s49 = scalar_select %p46, %s47, %s48
      %p52 = pneg %p46
      %p53 = scmp.eq.s32.totalorder %s16, 1
      %p54 = por %p52, %p53
      %p55 = scmp.ne.s32.totalorder %s47, %s50
      %p56 = scmp.eq.s32.totalorder %s16, 0
      %p57 = por %p55, %p56
      %p58 = scmp.ne.s32.totalorder %s47, %s50
      %p59 = scmp.eq.s32.totalorder %s21, 1
      %p60 = por %p58, %p59
      %p61 = scmp.ne.s32.totalorder %s50, %s51
      %p62 = scmp.eq.s32.totalorder %s21, 0
      %p63 = por %p61, %p62
      %p64 = scmp.ne.s32.totalorder %s50, %s51
      %p65 = scmp.eq.s32.totalorder %s22, 1
      %p66 = por %p64, %p65
      %p68 = scmp.ne.s32.totalorder %s51, %s67
      %p69 = scmp.eq.s32.totalorder %s22, 0
      %p70 = por %p68, %p69
      %s71 = ssub.s32 %s16, %s23
      %p72 = scmp.eq.s32.totalorder %s71, 0
      %s74 = sadd.s32 %s73, 1
      %s75 = scalar_select %p72, %s73, %s74
      %p78 = pneg %p72
      %p79 = scmp.eq.s32.totalorder %s16, 1
      %p80 = por %p78, %p79
      %p81 = scmp.ne.s32.totalorder %s73, %s76
      %p82 = scmp.eq.s32.totalorder %s16, 0
      %p83 = por %p81, %p82
      %p84 = scmp.ne.s32.totalorder %s73, %s76
      %p85 = scmp.eq.s32.totalorder %s21, 1
      %p86 = por %p84, %p85
      %p87 = scmp.ne.s32.totalorder %s76, %s77
      %p88 = scmp.eq.s32.totalorder %s21, 0
      %p89 = por %p87, %p88
      %p90 = scmp.ne.s32.totalorder %s76, %s77
      %p91 = scmp.eq.s32.totalorder %s22, 1
      %p92 = por %p90, %p91
      %p94 = scmp.ne.s32.totalorder %s77, %s93
      %p95 = scmp.eq.s32.totalorder %s22, 0
      %p96 = por %p94, %p95
      %s97 = ssub.s32 %s16, %s23
      %p98 = scmp.eq.s32.totalorder %s97, 0
      %s100 = sadd.s32 %s99, 1
      %s101 = scalar_select %p98, %s99, %s100
      %p104 = pneg %p98
      %p105 = scmp.eq.s32.totalorder %s16, 1
      %p106 = por %p104, %p105
      %p107 = scmp.ne.s32.totalorder %s99, %s102
      %p108 = scmp.eq.s32.totalorder %s16, 0
      %p109 = por %p107, %p108
      %p110 = scmp.ne.s32.totalorder %s99, %s102
      %p111 = scmp.eq.s32.totalorder %s21, 1
      %p112 = por %p110, %p111
      %p113 = scmp.ne.s32.totalorder %s102, %s103
      %p114 = scmp.eq.s32.totalorder %s21, 0
      %p115 = por %p113, %p114
      %p116 = scmp.ne.s32.totalorder %s102, %s103
      %p117 = scmp.eq.s32.totalorder %s22, 1
      %p118 = por %p116, %p117
      %p120 = scmp.ne.s32.totalorder %s103, %s119
      %p121 = scmp.eq.s32.totalorder %s22, 0
      %p122 = por %p120, %p121
      %p123 = scmp.le.s32.totalorder 1, %s16
      %p124 = scmp.lt.s32.totalorder %s16, 3
      %p125 = pnand %p123, %p124
      %p126 = pneg %p125
      // Predicated region
      $region9: #{bottleneck_forward.7} parent=5 // pred_check
        _
      $region10: #{bottleneck_forward.7} parent=5 // pred_check_branch
        %128 = sbr.rel (%p125) target = $region12
      $region11: #{bottleneck_forward.7} parent=5 // pred_region
        %s129 = ssub.s32 %s16, 1
        // Predicated region
        $region13: #{bottleneck_forward.7} parent=11 // pred_check
          %p130 = pneg %p37
        $region14: #{bottleneck_forward.7} parent=11 // pred_check_branch
          %132 = sbr.rel (%p130) target = $region16
        $region15: #{bottleneck_forward.7} parent=11 // pred_region
          %s134 = ssub.s32 512, 512
          %135 = vsyncadd [#allocation3], %s134
          %s136 = sshll.u32 [#allocation2], 4
          %s137 = int_to_ptr.vmem [resolvable:$true] %s136
          %142 = dma.hbm_to_vmem [thread:$0]  %s0, 512, %s137, [#allocation3], 128, 128, 8
        $region16: #{bottleneck_forward.7} parent=11 // pred_fallthru
          _
      $region12: #{bottleneck_forward.7} parent=5 // pred_fallthru
        _
      %p143 = scmp.lt.s32.totalorder %s16, 2
      // Predicated region
      $region17: #{bottleneck_forward.7} parent=5 // pred_check
        %p144 = pneg %p143
      $region18: #{bottleneck_forward.7} parent=5 // pred_check_branch
        %146 = sbr.rel (%p144) target = $region20
      $region19: #{bottleneck_forward.7} parent=5 // pred_region
        // Predicated region
        $region21: #{bottleneck_forward.7} parent=19 // pred_check
          %p147 = pneg %p57
        $region22: #{bottleneck_forward.7} parent=19 // pred_check_branch
          %149 = sbr.rel (%p147) target = $region24
        $region23: #{bottleneck_forward.7} parent=19 // pred_region
          %s150 = sand.u32 %s16, 1
          %s151 = scalar_lea.sflag [#allocation6], %s150
          %s152 = sand.u32 %s47, 1
          %s153 = smul.addr %s152, 128
          %s154 = scalar_lea.vmem [#allocation5], %s153
          %s155 = smul.u32 4, %s16
          %s157 = ssub.s32 2048, 2048
          %158 = vsyncadd %s151, %s157
          %s159 = smul.addr %s155, 128
          %s160 = scalar_lea.hbm %s1, %s159
          %s161 = sshll.u32 %s154, 4
          %s162 = int_to_ptr.vmem [resolvable:$true] %s161
          %167 = dma.hbm_to_vmem [thread:$0]  %s160, 2048, %s162, %s151, 1024, 512, 32
        $region24: #{bottleneck_forward.7} parent=19 // pred_fallthru
          _
        // Predicated region
        $region25: #{bottleneck_forward.7} parent=19 // pred_check
          %p168 = pneg %p83
        $region26: #{bottleneck_forward.7} parent=19 // pred_check_branch
          %170 = sbr.rel (%p168) target = $region28
        $region27: #{bottleneck_forward.7} parent=19 // pred_region
          %s171 = sand.u32 %s16, 1
          %s172 = scalar_lea.sflag [#allocation6], %s171
          %s173 = sand.u32 %s73, 1
          %s174 = smul.addr %s173, 128
          %s175 = scalar_lea.vmem [#allocation7], %s174
          %s176 = smul.u32 4, %s16
          %s178 = ssub.s32 2048, 2048
          %179 = vsyncadd %s172, %s178
          %s180 = smul.addr %s176, 128
          %s181 = scalar_lea.hbm %s2, %s180
          %s182 = sshll.u32 %s175, 4
          %s183 = int_to_ptr.vmem [resolvable:$true] %s182
          %188 = dma.hbm_to_vmem [thread:$0]  %s181, 2048, %s183, %s172, 1024, 512, 32
        $region28: #{bottleneck_forward.7} parent=19 // pred_fallthru
          _
      $region20: #{bottleneck_forward.7} parent=5 // pred_fallthru
        _
      %p189 = scmp.le.s32.totalorder 1, %s16
      %p190 = scmp.lt.s32.totalorder %s16, 3
      %p191 = pnand %p189, %p190
      %p192 = pneg %p191
      // Predicated region
      $region29: #{bottleneck_forward.7} parent=5 // pred_check
        _
      $region30: #{bottleneck_forward.7} parent=5 // pred_check_branch
        %194 = sbr.rel (%p191) target = $region32
      $region31: #{bottleneck_forward.7} parent=5 // pred_region
        %s195 = ssub.s32 %s16, 1
        // Predicated region
        $region33: #{bottleneck_forward.7} parent=31 // pred_check
          %p196 = pneg %p37
        $region34: #{bottleneck_forward.7} parent=31 // pred_check_branch
          %198 = sbr.rel (%p196) target = $region36
        $region35: #{bottleneck_forward.7} parent=31 // pred_region
          %199 = dma.done [#allocation3], 512
        $region36: #{bottleneck_forward.7} parent=31 // pred_fallthru
          _
        %s200 = sand.u32 %s21, 1
        %s201 = scalar_lea.sflag [#allocation6], %s200
        %s202 = sand.u32 %s50, 1
        %s203 = smul.addr %s202, 128
        %s204 = scalar_lea.vmem [#allocation5], %s203
        // Predicated region
        $region37: #{bottleneck_forward.7} parent=31 // pred_check
          %p205 = pneg %p63
        $region38: #{bottleneck_forward.7} parent=31 // pred_check_branch
          %207 = sbr.rel (%p205) target = $region40
        $region39: #{bottleneck_forward.7} parent=31 // pred_region
          %208 = dma.done %s201, 2048
        $region40: #{bottleneck_forward.7} parent=31 // pred_fallthru
          _
        %s209 = sand.u32 %s21, 1
        %s210 = scalar_lea.sflag [#allocation6], %s209
        %s211 = sand.u32 %s76, 1
        %s212 = smul.addr %s211, 128
        %s213 = scalar_lea.vmem [#allocation7], %s212
        // Predicated region
        $region41: #{bottleneck_forward.7} parent=31 // pred_check
          %p214 = pneg %p89
        $region42: #{bottleneck_forward.7} parent=31 // pred_check_branch
          %216 = sbr.rel (%p214) target = $region44
        $region43: #{bottleneck_forward.7} parent=31 // pred_region
          %217 = dma.done %s210, 2048
        $region44: #{bottleneck_forward.7} parent=31 // pred_fallthru
          _
        %p218 = pneg %p37
        %p219 = pneg %p34
        %s220 = sand.u32 %s21, 1
        %s221 = scalar_lea.sflag [#allocation6], %s220
        %s222 = sand.u32 %s50, 1
        %s223 = smul.addr %s222, 128
        %s224 = scalar_lea.vmem [#allocation5], %s223
        %p225 = pneg %p63
        %p226 = pneg %p60
        %s227 = sand.u32 %s21, 1
        %s228 = scalar_lea.sflag [#allocation6], %s227
        %s229 = sand.u32 %s76, 1
        %s230 = smul.addr %s229, 128
        %s231 = scalar_lea.vmem [#allocation7], %s230
        %p232 = pneg %p89
        %p233 = pneg %p86
        %p234 = pneg %p115
        %p235 = pneg %p112
        %s236 = sand.u32 %s102, 1
        %s237 = scalar_lea.sflag [#allocation4], %s236
        %s238 = sand.u32 %s102, 1
        %s239 = smul.addr %s238, 128
        %s240 = scalar_lea.vmem [#allocation8], %s239
        %s241 = smul.u32 4, %s21
        %s242 = smul.u32 4, %s21
        %s243 = smul.u32 4, %s21
        %v244 = vld [vmem:[#allocation2] sm:$0xff]
        %v245 = vld [vmem:[#allocation2 + $0x8] sm:$0xff]
        %v246 = vld [vmem:[#allocation2 + $0x10] sm:$0xff]
        %v247 = vld [vmem:[#allocation2 + $0x18] sm:$0xff]
        %v248 = vmul.f32 %v244, 0.0009765625
        %v249 = vmul.f32 %v245, 0.0009765625
        %v250 = vmul.f32 %v246, 0.0009765625
        %v251 = vmul.f32 %v247, 0.0009765625
        %v252 = vmul.f32 %v248, %v248
        %v253 = vmul.f32 %v249, %v249
        %v254 = vmul.f32 %v250, %v250
        %v255 = vmul.f32 %v251, %v251
        %260 = vrot.lane.b32.xlu0 %v252, 1
        %v261 = vpop.permute.xlu0 %260
        %262 = vrot.lane.b32.xlu0 %v253, 1
        %v263 = vpop.permute.xlu0 %262
        %264 = vrot.lane.b32.xlu0 %v254, 1
        %v265 = vpop.permute.xlu0 %264
        %266 = vrot.lane.b32.xlu0 %v255, 1
        %v267 = vpop.permute.xlu0 %266
        %v272 = vsub.f32 %v248, %v261
        %v273 = vsub.f32 %v249, %v263
        %v274 = vsub.f32 %v250, %v265
        %v275 = vsub.f32 %v251, %v267
        %v276 = vmax.f32 %v272, 0.0
        %v277 = vmax.f32 %v273, 0.0
        %v278 = vmax.f32 %v274, 0.0
        %v279 = vmax.f32 %v275, 0.0
        %v280 = vadd.f32 %v276, 1e-05
        %v281 = vadd.f32 %v277, 1e-05
        %v282 = vadd.f32 %v278, 1e-05
        %v283 = vadd.f32 %v279, 1e-05
        %v284 = vrsqrt.pop %v280
        %v285 = vrsqrt.pop %v281
        %v286 = vrsqrt.pop %v282
        %v287 = vrsqrt.pop %v283
        %292 = vrot.lane.b32.xlu0 %v284, 125
        %v293 = vpop.permute.xlu0 %292
        %294 = vrot.lane.b32.xlu0 %v285, 125
        %v295 = vpop.permute.xlu0 %294
        %296 = vrot.lane.b32.xlu0 %v286, 125
        %v297 = vpop.permute.xlu0 %296
        %298 = vrot.lane.b32.xlu0 %v287, 125
        %v299 = vpop.permute.xlu0 %298
        %v304 = vmul.f32 %v244, %v293
        %v305 = vmul.f32 %v245, %v295
        %v306 = vmul.f32 %v246, %v297
        %v307 = vmul.f32 %v247, %v299
        %312 = vrot.lane.b32.xlu0 %v304, 2
        %v313 = vpop.permute.xlu0 %312
        %314 = vrot.lane.b32.xlu0 %v305, 2
        %v315 = vpop.permute.xlu0 %314
        %316 = vrot.lane.b32.xlu0 %v306, 2
        %v317 = vpop.permute.xlu0 %316
        %318 = vrot.lane.b32.xlu0 %v307, 2
        %v319 = vpop.permute.xlu0 %318
        %v324 = vmul.f32 %v248, %v313
        %v325 = vmul.f32 %v249, %v315
        %v326 = vmul.f32 %v250, %v317
        %v327 = vmul.f32 %v251, %v319
        %332 = vrot.lane.b32.xlu0 %v324, 127
        %v333 = vpop.permute.xlu0 %332
        %334 = vrot.lane.b32.xlu0 %v325, 127
        %v335 = vpop.permute.xlu0 %334
        %336 = vrot.lane.b32.xlu0 %v326, 127
        %v337 = vpop.permute.xlu0 %336
        %338 = vrot.lane.b32.xlu0 %v327, 127
        %v339 = vpop.permute.xlu0 %338
        %v344 = vsub.f32 %v244, %v333
        %v345 = vsub.f32 %v245, %v335
        %v346 = vsub.f32 %v246, %v337
        %v347 = vsub.f32 %v247, %v339
        %v348 = vld [vmem:[%s204] sm:$0xff]
        %v349 = vld [vmem:[%s204 + $0x8] sm:$0xff]
        %v350 = vld [vmem:[%s204 + $0x10] sm:$0xff]
        %v351 = vld [vmem:[%s204 + $0x18] sm:$0xff]
        %v352 = vld [vmem:[%s204 + $0x20] sm:$0xff]
        %v353 = vld [vmem:[%s204 + $0x28] sm:$0xff]
        %v354 = vld [vmem:[%s204 + $0x30] sm:$0xff]
        %v355 = vld [vmem:[%s204 + $0x38] sm:$0xff]
        %v356 = vld [vmem:[%s204 + $0x40] sm:$0xff]
        %v357 = vld [vmem:[%s204 + $0x48] sm:$0xff]
        %v358 = vld [vmem:[%s204 + $0x50] sm:$0xff]
        %v359 = vld [vmem:[%s204 + $0x58] sm:$0xff]
        %v360 = vld [vmem:[%s204 + $0x60] sm:$0xff]
        %v361 = vld [vmem:[%s204 + $0x68] sm:$0xff]
        %v362 = vld [vmem:[%s204 + $0x70] sm:$0xff]
        %v363 = vld [vmem:[%s204 + $0x78] sm:$0xff]
        %364 = vset.pattern.permute.xlu0 0
        %365 = vperm.xlu0 %364, %v304
        %v366 = vpop.permute.xlu0 %365
        %368 = vset.pattern.permute.xlu0 0
        %369 = vperm.xlu0 %368, %v305
        %v370 = vpop.permute.xlu0 %369
        %372 = vset.pattern.permute.xlu0 0
        %373 = vperm.xlu0 %372, %v306
        %v374 = vpop.permute.xlu0 %373
        %376 = vset.pattern.permute.xlu0 0
        %377 = vperm.xlu0 %376, %v307
        %v378 = vpop.permute.xlu0 %377
        %v380 = vmul.f32 %v348, %v366
        %v381 = vmul.f32 %v349, %v366
        %v382 = vmul.f32 %v350, %v366
        %v383 = vmul.f32 %v351, %v366
        %v384 = vmul.f32 %v352, %v370
        %v385 = vmul.f32 %v353, %v370
        %v386 = vmul.f32 %v354, %v370
        %v387 = vmul.f32 %v355, %v370
        %v388 = vmul.f32 %v356, %v374
        %v389 = vmul.f32 %v357, %v374
        %v390 = vmul.f32 %v358, %v374
        %v391 = vmul.f32 %v359, %v374
        %v392 = vmul.f32 %v360, %v378
        %v393 = vmul.f32 %v361, %v378
        %v394 = vmul.f32 %v362, %v378
        %v395 = vmul.f32 %v363, %v378
        %397 = vset.pattern.permute.xlu0 1
        %398 = vperm.xlu0 %397, %v344
        %v399 = vpop.permute.xlu0 %398
        %402 = vset.pattern.permute.xlu0 1
        %403 = vperm.xlu0 %402, %v345
        %v404 = vpop.permute.xlu0 %403
        %407 = vset.pattern.permute.xlu0 1
        %408 = vperm.xlu0 %407, %v346
        %v409 = vpop.permute.xlu0 %408
        %412 = vset.pattern.permute.xlu0 1
        %413 = vperm.xlu0 %412, %v347
        %v414 = vpop.permute.xlu0 %413
        %v416 = vadd.f32 %v380, %v399
        %v417 = vadd.f32 %v381, %v399
        %v418 = vadd.f32 %v382, %v399
        %v419 = vadd.f32 %v383, %v399
        %v420 = vadd.f32 %v384, %v404
        %v421 = vadd.f32 %v385, %v404
        %v422 = vadd.f32 %v386, %v404
        %v423 = vadd.f32 %v387, %v404
        %v424 = vadd.f32 %v388, %v409
        %v425 = vadd.f32 %v389, %v409
        %v426 = vadd.f32 %v390, %v409
        %v427 = vadd.f32 %v391, %v409
        %v428 = vadd.f32 %v392, %v414
        %v429 = vadd.f32 %v393, %v414
        %v430 = vadd.f32 %v394, %v414
        %v431 = vadd.f32 %v395, %v414
        %v432 = vld [vmem:[%s213] sm:$0xff]
        %v433 = vld [vmem:[%s213 + $0x8] sm:$0xff]
        %v434 = vld [vmem:[%s213 + $0x10] sm:$0xff]
        %v435 = vld [vmem:[%s213 + $0x18] sm:$0xff]
        %v436 = vld [vmem:[%s213 + $0x20] sm:$0xff]
        %v437 = vld [vmem:[%s213 + $0x28] sm:$0xff]
        %v438 = vld [vmem:[%s213 + $0x30] sm:$0xff]
        %v439 = vld [vmem:[%s213 + $0x38] sm:$0xff]
        %v440 = vld [vmem:[%s213 + $0x40] sm:$0xff]
        %v441 = vld [vmem:[%s213 + $0x48] sm:$0xff]
        %v442 = vld [vmem:[%s213 + $0x50] sm:$0xff]
        %v443 = vld [vmem:[%s213 + $0x58] sm:$0xff]
        %v444 = vld [vmem:[%s213 + $0x60] sm:$0xff]
        %v445 = vld [vmem:[%s213 + $0x68] sm:$0xff]
        %v446 = vld [vmem:[%s213 + $0x70] sm:$0xff]
        %v447 = vld [vmem:[%s213 + $0x78] sm:$0xff]
        %v448 = vadd.f32 %v416, %v432
        %v449 = vadd.f32 %v417, %v433
        %v450 = vadd.f32 %v418, %v434
        %v451 = vadd.f32 %v419, %v435
        %v452 = vadd.f32 %v420, %v436
        %v453 = vadd.f32 %v421, %v437
        %v454 = vadd.f32 %v422, %v438
        %v455 = vadd.f32 %v423, %v439
        %v456 = vadd.f32 %v424, %v440
        %v457 = vadd.f32 %v425, %v441
        %v458 = vadd.f32 %v426, %v442
        %v459 = vadd.f32 %v427, %v443
        %v460 = vadd.f32 %v428, %v444
        %v461 = vadd.f32 %v429, %v445
        %v462 = vadd.f32 %v430, %v446
        %v463 = vadd.f32 %v431, %v447
        %v464 = vmax.f32 %v448, 0.0
        %v465 = vmax.f32 %v449, 0.0
        %v466 = vmax.f32 %v450, 0.0
        %v467 = vmax.f32 %v451, 0.0
        %v468 = vmax.f32 %v452, 0.0
        %v469 = vmax.f32 %v453, 0.0
        %v470 = vmax.f32 %v454, 0.0
        %v471 = vmax.f32 %v455, 0.0
        %v472 = vmax.f32 %v456, 0.0
        %v473 = vmax.f32 %v457, 0.0
        %v474 = vmax.f32 %v458, 0.0
        %v475 = vmax.f32 %v459, 0.0
        %v476 = vmax.f32 %v460, 0.0
        %v477 = vmax.f32 %v461, 0.0
        %v478 = vmax.f32 %v462, 0.0
        %v479 = vmax.f32 %v463, 0.0
        %480 = vst [vmem:[%s240] sm:$0xff] %v464
        %481 = vst [vmem:[%s240 + $0x8] sm:$0xff] %v465
        %482 = vst [vmem:[%s240 + $0x10] sm:$0xff] %v466
        %483 = vst [vmem:[%s240 + $0x18] sm:$0xff] %v467
        %484 = vst [vmem:[%s240 + $0x20] sm:$0xff] %v468
        %485 = vst [vmem:[%s240 + $0x28] sm:$0xff] %v469
        %486 = vst [vmem:[%s240 + $0x30] sm:$0xff] %v470
        %487 = vst [vmem:[%s240 + $0x38] sm:$0xff] %v471
        %488 = vst [vmem:[%s240 + $0x40] sm:$0xff] %v472
        %489 = vst [vmem:[%s240 + $0x48] sm:$0xff] %v473
        %490 = vst [vmem:[%s240 + $0x50] sm:$0xff] %v474
        %491 = vst [vmem:[%s240 + $0x58] sm:$0xff] %v475
        %492 = vst [vmem:[%s240 + $0x60] sm:$0xff] %v476
        %493 = vst [vmem:[%s240 + $0x68] sm:$0xff] %v477
        %494 = vst [vmem:[%s240 + $0x70] sm:$0xff] %v478
        %495 = vst [vmem:[%s240 + $0x78] sm:$0xff] %v479
        %s496 = sand.u32 %s102, 1
        %s497 = scalar_lea.sflag [#allocation4], %s496
        %s498 = sand.u32 %s102, 1
        %s499 = smul.addr %s498, 128
        %s500 = scalar_lea.vmem [#allocation8], %s499
        // Predicated region
        $region45: #{bottleneck_forward.7} parent=31 // pred_check
          %p501 = pneg %p112
        $region46: #{bottleneck_forward.7} parent=31 // pred_check_branch
          %503 = sbr.rel (%p501) target = $region48
        $region47: #{bottleneck_forward.7} parent=31 // pred_region
          %s504 = smul.u32 4, %s21
          %s506 = ssub.s32 2048, 2048
          %507 = vsyncadd %s497, %s506
          %s508 = smul.addr %s504, 128
          %s509 = scalar_lea.hbm %s3, %s508
          %s510 = sshll.u32 %s500, 4
          %s511 = int_to_ptr.vmem [resolvable:$true] %s510
          %516 = dma.vmem_to_hbm [thread:$0]  %s511, 2048, %s509, %s497, 512, 1024, 32
        $region48: #{bottleneck_forward.7} parent=31 // pred_fallthru
          _
      $region32: #{bottleneck_forward.7} parent=5 // pred_fallthru
        _
      %p517 = scmp.le.s32.totalorder 2, %s16
      // Predicated region
      $region49: #{bottleneck_forward.7} parent=5 // pred_check
        %p518 = pneg %p517
      $region50: #{bottleneck_forward.7} parent=5 // pred_check_branch
        %520 = sbr.rel (%p518) target = $region52
      $region51: #{bottleneck_forward.7} parent=5 // pred_region
        %s521 = ssub.s32 %s16, 2
        // Predicated region
        $region53: #{bottleneck_forward.7} parent=51 // pred_check
          %p522 = pneg %p118
        $region54: #{bottleneck_forward.7} parent=51 // pred_check_branch
          %524 = sbr.rel (%p522) target = $region56
        $region55: #{bottleneck_forward.7} parent=51 // pred_region
          %s525 = sand.u32 %s103, 1
          %s526 = scalar_lea.sflag [#allocation4], %s525
          %s527 = sand.u32 %s103, 1
          %s528 = smul.addr %s527, 128
          %s529 = scalar_lea.vmem [#allocation8], %s528
          %530 = dma.done %s526, 2048
        $region56: #{bottleneck_forward.7} parent=51 // pred_fallthru
          _
      $region52: #{bottleneck_forward.7} parent=5 // pred_fallthru
        _
    $region6: #{bottleneck_forward.7} parent=1 // loop_footer
      %s20 = sadd.s32 1, %s16
    $region7: #{bottleneck_forward.7} parent=1 // loop_footer_branch
      %15 = sbr.rel target = $region3
    $region8: #{bottleneck_forward.7} parent=1 // loop_exit
      _
    %531 = vsyncpa [#allocation3], 1
    %s532 = scalar_lea.sflag [#allocation3], 1
    %533 = vsyncpa %s532, 1
    %534 = vsyncpa [#allocation6], 1
    %s535 = scalar_lea.sflag [#allocation6], 1
    %536 = vsyncpa %s535, 1
    %537 = vsyncpa [#allocation4], 1
    %s538 = scalar_lea.sflag [#allocation4], 1
    %539 = vsyncpa %s538, 1

</llo_original>
